<compile_context>
chip_gen: v6e
topology: v6e:2x2x1
jax: 0.10.0
libtpu: 0.0.40
codegen_flags: <defaults>
</compile_context>

<pallas_src>
import functools

import jax
import jax.numpy as jnp
from jax import lax
from jax.experimental import pallas as pl
from jax.experimental.pallas import tpu as pltpu

_LANE = 128
_SUBLANE = 8
_VMEM_LIMIT = 48 * 1024 * 1024  # headroom below v7x's 64 MiB physical VMEM


def _round_up(x, m):
    return ((x + m - 1) // m) * m


def _pick_block(total, preferred, align):
    """Largest multiple of `align` that divides `total` and is <= max(preferred, align).

    `total` is always a multiple of `align` by construction (padding)."""
    preferred = max(preferred, align)
    if total <= preferred:
        return total
    best = align
    cand = align
    while cand <= preferred:
        if total % cand == 0:
            best = cand
        cand += align
    return best


# ---------------------------------------------------------------------------
# Generic tiled matmul + bias kernel (used for the input and output projections)
# ---------------------------------------------------------------------------
def _matmul_bias_kernel(x_ref, w_ref, b_ref, o_ref):
    o_ref[...] = (
        jnp.dot(x_ref[...], w_ref[...], preferred_element_type=jnp.float32)
        + b_ref[...]
    ).astype(o_ref.dtype)


def _matmul_bias(x, w, b, *, mb=256, nb=512):
    """y = x @ w + b.  x: (M, K), w: (K, N), b: (1, N).  M % 8 == 0, N % 128 == 0.

    K is small here (embedding dim / padded hidden), so it is kept un-tiled and the
    weight tile stays resident across the M axis."""
    M, K = x.shape
    N = w.shape[1]
    mb = _pick_block(M, mb, _SUBLANE)
    nb = _pick_block(N, nb, _LANE)
    return pl.pallas_call(
        _matmul_bias_kernel,
        out_shape=jax.ShapeDtypeStruct((M, N), jnp.float32),
        grid_spec=pltpu.PrefetchScalarGridSpec(
            num_scalar_prefetch=0,
            grid=(M // mb, N // nb),
            in_specs=[
                pl.BlockSpec((mb, K), lambda i, j: (i, 0)),   # activations
                pl.BlockSpec((K, nb), lambda i, j: (0, j)),   # weight tile
                pl.BlockSpec((1, nb), lambda i, j: (0, j)),   # bias tile
            ],
            out_specs=pl.BlockSpec((mb, nb), lambda i, j: (i, j)),
        ),
        compiler_params=pltpu.CompilerParams(
            dimension_semantics=("parallel", "parallel"),
            vmem_limit_bytes=_VMEM_LIMIT,
        ),
    )(x, w, b)


# ---------------------------------------------------------------------------
# Serial LSTM recurrence: only h @ W_hh^T + precomputed input gates per step.
# ---------------------------------------------------------------------------
def _lstm_recurrence_kernel(gx_ref, whh_ref, h0_ref, c0_ref,
                            hall_ref, hT_ref, cT_ref, *, tb, t_total, t_padded, hp):
    tblk = pl.program_id(0)

    @pl.when(tblk == 0)
    def _():
        hT_ref[...] = h0_ref[...]
        cT_ref[...] = c0_ref[...]

    whh = whh_ref[...]            # (Hp, 4*Hp), resident (constant index_map -> no re-DMA)
    t0 = tblk * tb
    needs_guard = t_padded != t_total   # static: resolved at trace time

    def sigmoid(x):
        # one EUP push (tanh) per element instead of exp + reciprocal
        return 0.5 * jnp.tanh(0.5 * x) + 0.5

    def step(tt, carry):
        h, c = carry
        # gates_x already contains x_t @ W_ih^T + (b_ih + b_hh)
        gates = gx_ref[tt] + jnp.dot(h, whh, preferred_element_type=jnp.float32)
        # PyTorch gate order [i, f, g, o]; Hp is a multiple of 128 -> lane-aligned slices
        i_g = sigmoid(gates[:, 0 * hp:1 * hp])
        f_g = sigmoid(gates[:, 1 * hp:2 * hp])
        g_g = jnp.tanh(gates[:, 2 * hp:3 * hp])
        o_g = sigmoid(gates[:, 3 * hp:4 * hp])

        c_new = f_g * c + i_g * g_g
        h_new = o_g * jnp.tanh(c_new)

        hall_ref[tt] = h_new      # padded timesteps are sliced off by the wrapper

        if needs_guard:
            # keep hT/cT equal to the state after exactly t_total steps
            valid = (t0 + tt) < t_total
            h = jnp.where(valid, h_new, h)
            c = jnp.where(valid, c_new, c)
        else:
            h, c = h_new, c_new
        return (h, c)

    h, c = lax.fori_loop(0, tb, step, (hT_ref[...], cT_ref[...]), unroll=True)
    hT_ref[...] = h
    cT_ref[...] = c


def _lstm_recurrence(gates_x, whh_t, h0, c0, *, tb, t_total):
    t_pad, bp, four_hp = gates_x.shape
    hp = four_hp // 4
    kernel = functools.partial(_lstm_recurrence_kernel,
                               tb=tb, t_total=t_total, t_padded=t_pad, hp=hp)
    return pl.pallas_call(
        kernel,
        out_shape=(jax.ShapeDtypeStruct((t_pad, bp, hp), jnp.float32),
                   jax.ShapeDtypeStruct((bp, hp), jnp.float32),
                   jax.ShapeDtypeStruct((bp, hp), jnp.float32)),
        grid_spec=pltpu.PrefetchScalarGridSpec(
            num_scalar_prefetch=0,
            grid=(t_pad // tb,),
            in_specs=[
                pl.BlockSpec((tb, bp, four_hp), lambda t: (t, 0, 0)),  # gates_x block
                pl.BlockSpec((hp, four_hp), lambda t: (0, 0)),         # W_hh^T (resident)
                pl.BlockSpec((bp, hp), lambda t: (0, 0)),              # h0
                pl.BlockSpec((bp, hp), lambda t: (0, 0)),              # c0
            ],
            out_specs=[
                pl.BlockSpec((tb, bp, hp), lambda t: (t, 0, 0)),       # h_all block
                pl.BlockSpec((bp, hp), lambda t: (0, 0)),              # h_T (state carry)
                pl.BlockSpec((bp, hp), lambda t: (0, 0)),              # c_T (state carry)
            ],
        ),
        compiler_params=pltpu.CompilerParams(
            dimension_semantics=("arbitrary",),
            vmem_limit_bytes=_VMEM_LIMIT,
        ),
    )(gates_x, whh_t, h0, c0)


# ---------------------------------------------------------------------------
# Wrapper: embedding gather (time-major), padding to HW tiles, three pallas_calls.
# ---------------------------------------------------------------------------
@functools.partial(jax.jit, static_argnames=("time_block",))
def decoder_forward(input_seqs, hidden, params, *, time_block=32):
    """input_seqs: (B, T) int32; hidden: (h0, c0) each (1, B, H).
    Returns (logits (B, T, V), (hT, cT) each (1, B, H))."""
    emb_table, w_ih, w_hh, b_ih, b_hh, w_out, b_out = (
        params["embedding"], params["w_ih"], params["w_hh"],
        params["b_ih"], params["b_hh"], params["w_out"], params["b_out"])

    B, T = input_seqs.shape
    V, E = emb_table.shape
    H = w_hh.shape[1]

    Bp = _round_up(max(B, _SUBLANE), _SUBLANE)    # sublane alignment
    Hp = _round_up(max(H, _LANE), _LANE)          # lane alignment (gate slices per 128)
    Vp = _round_up(max(V, _LANE), _LANE)
    Tb = min(time_block, T)                       # timesteps per serial grid step
    Tp = _round_up(T, Tb)

    # --- pad weights per gate block so padded hidden units stay exactly zero ---
    def pad_gate_rows(w):                          # (4H, K) -> (4Hp, K)
        w4 = jnp.pad(w.reshape(4, H, -1), ((0, 0), (0, Hp - H), (0, 0)))
        return w4.reshape(4 * Hp, -1)

    wih_t = pad_gate_rows(w_ih).T                                  # (E, 4Hp)
    whh_t = jnp.pad(pad_gate_rows(w_hh), ((0, 0), (0, Hp - H))).T  # (Hp, 4Hp)
    b_p = jnp.pad((b_ih + b_hh).reshape(4, H),
                  ((0, 0), (0, Hp - H))).reshape(1, 4 * Hp)        # (1, 4Hp)
    wout_t = jnp.pad(w_out, ((0, Vp - V), (0, Hp - H))).T          # (Hp, Vp)
    bout_p = jnp.pad(b_out, (0, Vp - V)).reshape(1, Vp)            # (1, Vp)

    # --- embedding gather directly in time-major layout (no big transpose) ---
    # TODO(synk): the row gather stays in XLA; a scalar-prefetch pl.Element gather is
    # possible but not worth it at these sizes.
    ids = jnp.pad(input_seqs, ((0, Bp - B), (0, Tp - T)))          # (Bp, Tp), pad token 0
    x_tm = jnp.take(emb_table, ids.T, axis=0)                      # (Tp, Bp, E)

    h0 = jnp.pad(hidden[0][0], ((0, Bp - B), (0, Hp - H)))         # (Bp, Hp)
    c0 = jnp.pad(hidden[1][0], ((0, Bp - B), (0, Hp - H)))         # (Bp, Hp)

    # (1) hoisted input projection over all T*B rows (parallel matmul kernel)
    gates_x = _matmul_bias(x_tm.reshape(Tp * Bp, E), wih_t, b_p)   # (Tp*Bp, 4Hp)
    gates_x = gates_x.reshape(Tp, Bp, 4 * Hp)

    # (2) serial recurrence, Tb steps per grid iteration, state carried in outputs
    h_all, hT, cT = _lstm_recurrence(gates_x, whh_t, h0, c0, tb=Tb, t_total=T)

    # (3) deferred output projection over all T*B rows (parallel matmul kernel)
    logits_flat = _matmul_bias(h_all.reshape(Tp * Bp, Hp), wout_t, bout_p)  # (Tp*Bp, Vp)
    logits = logits_flat.reshape(Tp, Bp, Vp)[:T, :B, :V]
    # final batch-first layout; pure data reorganization left to XLA.
    logits = jnp.transpose(logits, (1, 0, 2))                      # (B, T, V)

    return logits, (hT[:B, :H][None], cT[:B, :H][None])


# ---------------------------------------------------------------------------
# Pure-JAX reference of the PyTorch forward.
# ---------------------------------------------------------------------------
def decoder_forward_ref(input_seqs, hidden, params):
    emb_table, w_ih, w_hh, b_ih, b_hh, w_out, b_out = (
        params["embedding"], params["w_ih"], params["w_hh"],
        params["b_ih"], params["b_hh"], params["w_out"], params["b_out"])
    H = w_hh.shape[1]
    embedded = emb_table[input_seqs]                      # (B, T, E)
    h, c = hidden[0][0], hidden[1][0]

    def step(carry, x_t):
        h, c = carry
        gates = x_t @ w_ih.T + h @ w_hh.T + b_ih + b_hh
        i = jax.nn.sigmoid(gates[:, 0 * H:1 * H])
        f = jax.nn.sigmoid(gates[:, 1 * H:2 * H])
        g = jnp.tanh(gates[:, 2 * H:3 * H])
        o = jax.nn.sigmoid(gates[:, 3 * H:4 * H])
        c = f * c + i * g
        h = o * jnp.tanh(c)
        return (h, c), h

    (h, c), hs = jax.lax.scan(step, (h, c), jnp.transpose(embedded, (1, 0, 2)))
    out = jnp.transpose(hs, (1, 0, 2)) @ w_out.T + b_out
    return out, (h[None], c[None])


def init_params(key, output_size, embedding_dim, hidden_size):
    ks = jax.random.split(key, 7)
    s = 0.1
    emb = s * jax.random.normal(ks[0], (output_size, embedding_dim), jnp.float32)
    emb = emb.at[0].set(0.0)  # padding_idx=0
    return {
        "embedding": emb,
        "w_ih": s * jax.random.normal(ks[1], (4 * hidden_size, embedding_dim), jnp.float32),
        "w_hh": s * jax.random.normal(ks[2], (4 * hidden_size, hidden_size), jnp.float32),
        "b_ih": s * jax.random.normal(ks[3], (4 * hidden_size,), jnp.float32),
        "b_hh": s * jax.random.normal(ks[4], (4 * hidden_size,), jnp.float32),
        "w_out": s * jax.random.normal(ks[5], (output_size, hidden_size), jnp.float32),
        "b_out": s * jax.random.normal(ks[6], (output_size,), jnp.float32),
    }


if __name__ == "__main__":
    B, T = 2, 8
    output_size, embedding_dim, hidden_size = 16, 32, 32

    key = jax.random.PRNGKey(0)
    k_par, k_seq, k_h, k_c = jax.random.split(key, 4)

    params = init_params(k_par, output_size, embedding_dim, hidden_size)
    input_seqs = jax.random.randint(k_seq, (B, T), 0, output_size, jnp.int32)
    h0 = 0.1 * jax.random.normal(k_h, (1, B, hidden_size), jnp.float32)
    c0 = 0.1 * jax.random.normal(k_c, (1, B, hidden_size), jnp.float32)

    logits, (hT, cT) = decoder_forward(input_seqs, (h0, c0), params)
    jax.block_until_ready((logits, hT, cT))

    ref_logits, (ref_h, ref_c) = decoder_forward_ref(input_seqs, (h0, c0), params)
    assert logits.shape == (B, T, output_size)
    assert hT.shape == (1, B, hidden_size) and cT.shape == (1, B, hidden_size)
    assert jnp.allclose(logits, ref_logits, atol=1e-5, rtol=1e-5)
    assert jnp.allclose(hT, ref_h, atol=1e-5, rtol=1e-5)
    assert jnp.allclose(cT, ref_c, atol=1e-5, rtol=1e-5)

    print("KERNEL_OK")
</pallas_src>

<mosaic_0001>
module attributes {stable_mosaic.version = 11 : i64} {
  func.func @_matmul_bias_kernel(%arg0: i32, %arg1: i32, %arg2: memref<64x32xf32, #tpu.memory_space<vmem>>, %arg3: memref<32x512xf32, #tpu.memory_space<vmem>>, %arg4: memref<1x512xf32, #tpu.memory_space<vmem>>, %arg5: memref<64x512xf32, #tpu.memory_space<vmem>>) attributes {dimension_semantics = [#tpu.dimension_semantics<parallel>, #tpu.dimension_semantics<parallel>], iteration_bounds = array<i64: 1, 1>, scalar_prefetch = 0 : i64, scratch_operands = 0 : i64, tpu.core_type = #tpu.core_type<tc>, window_params = [{transform_indices = @transform_0, window_bounds = array<i64: 64, 32>}, {transform_indices = @transform_1, window_bounds = array<i64: 32, 512>}, {transform_indices = @transform_2, window_bounds = array<i64: 1, 512>}, {transform_indices = @transform_3, window_bounds = array<i64: 64, 512>}]} {
    %c0 = arith.constant 0 : index
    %c0_0 = arith.constant 0 : index
    %0 = vector.load %arg2[%c0, %c0_0] : memref<64x32xf32, #tpu.memory_space<vmem>>, vector<64x32xf32>
    %c0_1 = arith.constant 0 : index
    %c0_2 = arith.constant 0 : index
    %1 = vector.load %arg3[%c0_1, %c0_2] : memref<32x512xf32, #tpu.memory_space<vmem>>, vector<32x512xf32>
    %cst = arith.constant dense<0.000000e+00> : vector<64x512xf32>
    %2 = tpu.matmul %0, %1, %cst {dimension_numbers = #tpu.dot_dimension_numbers<[1], [0], [0], [1], [0, 0, 1, 1], [], []>} : vector<64x32xf32>, vector<32x512xf32>, vector<64x512xf32> -> vector<64x512xf32>
    %c0_3 = arith.constant 0 : index
    %c0_4 = arith.constant 0 : index
    %3 = vector.load %arg4[%c0_3, %c0_4] : memref<1x512xf32, #tpu.memory_space<vmem>>, vector<1x512xf32>
    %4 = vector.broadcast %3 : vector<1x512xf32> to vector<64x512xf32>
    %5 = arith.addf %2, %4 : vector<64x512xf32>
    %c0_5 = arith.constant 0 : index
    %c0_6 = arith.constant 0 : index
    %6 = vector.load %arg5[%c0_5, %c0_6] : memref<64x512xf32, #tpu.memory_space<vmem>>, vector<64x512xf32>
    tpu.vector_store %arg5[%c0_5, %c0_6], %5 {strides = array<i32>} : memref<64x512xf32, #tpu.memory_space<vmem>>, vector<64x512xf32>,
    return
  }
  func.func @transform_0(%arg0: i32, %arg1: i32) -> (i32, i32) {
    %c0_i32 = arith.constant 0 : i32
    %c0_i32_0 = arith.constant 0 : i32
    return %arg0, %c0_i32 : i32, i32
  }
  func.func @transform_1(%arg0: i32, %arg1: i32) -> (i32, i32) {
    %c0_i32 = arith.constant 0 : i32
    %c0_i32_0 = arith.constant 0 : i32
    return %c0_i32, %arg1 : i32, i32
  }
  func.func @transform_2(%arg0: i32, %arg1: i32) -> (i32, i32) {
    %c0_i32 = arith.constant 0 : i32
    %c0_i32_0 = arith.constant 0 : i32
    return %c0_i32, %arg1 : i32, i32
  }
  func.func @transform_3(%arg0: i32, %arg1: i32) -> (i32, i32) {
    %c0_i32 = arith.constant 0 : i32
    return %arg0, %arg1 : i32, i32
  }
}

module attributes {stable_mosaic.version = 11 : i64} {
  func.func @_lstm_recurrence_kernel(%arg0: i32, %arg1: memref<8x8x512xf32, #tpu.memory_space<vmem>>, %arg2: memref<128x512xf32, #tpu.memory_space<vmem>>, %arg3: memref<8x128xf32, #tpu.memory_space<vmem>>, %arg4: memref<8x128xf32, #tpu.memory_space<vmem>>, %arg5: memref<8x8x128xf32, #tpu.memory_space<vmem>>, %arg6: memref<8x128xf32, #tpu.memory_space<vmem>>, %arg7: memref<8x128xf32, #tpu.memory_space<vmem>>) attributes {dimension_semantics = [#tpu.dimension_semantics<arbitrary>], iteration_bounds = array<i64: 1>, scalar_prefetch = 0 : i64, scratch_operands = 0 : i64, tpu.core_type = #tpu.core_type<tc>, window_params = [{transform_indices = @transform_0, window_bounds = array<i64: 8, 8, 512>}, {pipeline_mode = #tpu.pipeline_mode<synchronous>, transform_indices = @transform_1, window_bounds = array<i64: 128, 512>}, {pipeline_mode = #tpu.pipeline_mode<synchronous>, transform_indices = @transform_2, window_bounds = array<i64: 8, 128>}, {pipeline_mode = #tpu.pipeline_mode<synchronous>, transform_indices = @transform_3, window_bounds = array<i64: 8, 128>}, {transform_indices = @transform_4, window_bounds = array<i64: 8, 8, 128>}, {pipeline_mode = #tpu.pipeline_mode<synchronous>, transform_indices = @transform_5, window_bounds = array<i64: 8, 128>}, {pipeline_mode = #tpu.pipeline_mode<synchronous>, transform_indices = @transform_6, window_bounds = array<i64: 8, 128>}]} {
    %c0_i32 = arith.constant 0 : i32
    %0 = arith.cmpi eq, %arg0, %c0_i32 : i32
    %1 = arith.extui %0 : i1 to i32
    %c0_i32_0 = arith.constant 0 : i32
    %2 = arith.cmpi ne, %1, %c0_i32_0 : i32
    scf.if %2 {
      %c0_122 = arith.constant 0 : index
      %c0_123 = arith.constant 0 : index
      %328 = vector.load %arg3[%c0_122, %c0_123] : memref<8x128xf32, #tpu.memory_space<vmem>>, vector<8x128xf32>
      %c0_124 = arith.constant 0 : index
      %c0_125 = arith.constant 0 : index
      %329 = vector.load %arg6[%c0_124, %c0_125] : memref<8x128xf32, #tpu.memory_space<vmem>>, vector<8x128xf32>
      tpu.vector_store %arg6[%c0_124, %c0_125], %328 {strides = array<i32>} : memref<8x128xf32, #tpu.memory_space<vmem>>, vector<8x128xf32>,
      %c0_126 = arith.constant 0 : index
      %c0_127 = arith.constant 0 : index
      %330 = vector.load %arg4[%c0_126, %c0_127] : memref<8x128xf32, #tpu.memory_space<vmem>>, vector<8x128xf32>
      %c0_128 = arith.constant 0 : index
      %c0_129 = arith.constant 0 : index
      %331 = vector.load %arg7[%c0_128, %c0_129] : memref<8x128xf32, #tpu.memory_space<vmem>>, vector<8x128xf32>
      tpu.vector_store %arg7[%c0_128, %c0_129], %330 {strides = array<i32>} : memref<8x128xf32, #tpu.memory_space<vmem>>, vector<8x128xf32>,
    } else {
    }
    %c0 = arith.constant 0 : index
    %c0_1 = arith.constant 0 : index
    %3 = vector.load %arg2[%c0, %c0_1] : memref<128x512xf32, #tpu.memory_space<vmem>>, vector<128x512xf32>
    %c0_2 = arith.constant 0 : index
    %c0_3 = arith.constant 0 : index
    %4 = vector.load %arg6[%c0_2, %c0_3] : memref<8x128xf32, #tpu.memory_space<vmem>>, vector<8x128xf32>
    %c0_4 = arith.constant 0 : index
    %c0_5 = arith.constant 0 : index
    %5 = vector.load %arg7[%c0_4, %c0_5] : memref<8x128xf32, #tpu.memory_space<vmem>>, vector<8x128xf32>
    %c0_i32_6 = arith.constant 0 : i32
    %6 = arith.index_cast %c0_i32_6 : i32 to index
    %c0_7 = arith.constant 0 : index
    %c0_8 = arith.constant 0 : index
    %7 = vector.load %arg1[%6, %c0_7, %c0_8] : memref<8x8x512xf32, #tpu.memory_space<vmem>>, vector<1x8x512xf32>
    %8 = vector.shape_cast %7 : vector<1x8x512xf32> to vector<8x512xf32>
    %cst = arith.constant dense<0.000000e+00> : vector<8x512xf32>
    %9 = tpu.matmul %4, %3, %cst {dimension_numbers = #tpu.dot_dimension_numbers<[1], [0], [0], [1], [0, 0, 1, 1], [], []>} : vector<8x128xf32>, vector<128x512xf32>, vector<8x512xf32> -> vector<8x512xf32>
    %10 = arith.addf %8, %9 : vector<8x512xf32>
    %11 = vector.extract_strided_slice %10 {offsets = [0, 0], sizes = [8, 128], strides = [1, 1]} : vector<8x512xf32> to vector<8x128xf32>
    %cst_9 = arith.constant 5.000000e-01 : f32
    %12 = vector.broadcast %cst_9 : f32 to vector<8x128xf32>
    %13 = arith.mulf %12, %11 : vector<8x128xf32>
    %14 = math.tanh %13 : vector<8x128xf32>
    %cst_10 = arith.constant 5.000000e-01 : f32
    %15 = vector.broadcast %cst_10 : f32 to vector<8x128xf32>
    %16 = arith.mulf %15, %14 : vector<8x128xf32>
    %cst_11 = arith.constant 5.000000e-01 : f32
    %17 = vector.broadcast %cst_11 : f32 to vector<8x128xf32>
    %18 = arith.addf %16, %17 : vector<8x128xf32>
    %19 = vector.extract_strided_slice %10 {offsets = [0, 128], sizes = [8, 128], strides = [1, 1]} : vector<8x512xf32> to vector<8x128xf32>
    %cst_12 = arith.constant 5.000000e-01 : f32
    %20 = vector.broadcast %cst_12 : f32 to vector<8x128xf32>
    %21 = arith.mulf %20, %19 : vector<8x128xf32>
    %22 = math.tanh %21 : vector<8x128xf32>
    %cst_13 = arith.constant 5.000000e-01 : f32
    %23 = vector.broadcast %cst_13 : f32 to vector<8x128xf32>
    %24 = arith.mulf %23, %22 : vector<8x128xf32>
    %cst_14 = arith.constant 5.000000e-01 : f32
    %25 = vector.broadcast %cst_14 : f32 to vector<8x128xf32>
    %26 = arith.addf %24, %25 : vector<8x128xf32>
    %27 = vector.extract_strided_slice %10 {offsets = [0, 256], sizes = [8, 128], strides = [1, 1]} : vector<8x512xf32> to vector<8x128xf32>
    %28 = math.tanh %27 : vector<8x128xf32>
    %29 = vector.extract_strided_slice %10 {offsets = [0, 384], sizes = [8, 128], strides = [1, 1]} : vector<8x512xf32> to vector<8x128xf32>
    %cst_15 = arith.constant 5.000000e-01 : f32
    %30 = vector.broadcast %cst_15 : f32 to vector<8x128xf32>
    %31 = arith.mulf %30, %29 : vector<8x128xf32>
    %32 = math.tanh %31 : vector<8x128xf32>
    %cst_16 = arith.constant 5.000000e-01 : f32
    %33 = vector.broadcast %cst_16 : f32 to vector<8x128xf32>
    %34 = arith.mulf %33, %32 : vector<8x128xf32>
    %cst_17 = arith.constant 5.000000e-01 : f32
    %35 = vector.broadcast %cst_17 : f32 to vector<8x128xf32>
    %36 = arith.addf %34, %35 : vector<8x128xf32>
    %37 = arith.mulf %26, %5 : vector<8x128xf32>
    %38 = arith.mulf %18, %28 : vector<8x128xf32>
    %39 = arith.addf %37, %38 : vector<8x128xf32>
    %40 = math.tanh %39 : vector<8x128xf32>
    %41 = arith.mulf %36, %40 : vector<8x128xf32>
    %42 = arith.index_cast %c0_i32_6 : i32 to index
    %c0_18 = arith.constant 0 : index
    %c0_19 = arith.constant 0 : index
    %43 = vector.load %arg5[%42, %c0_18, %c0_19] : memref<8x8x128xf32, #tpu.memory_space<vmem>>, vector<1x8x128xf32>
    %44 = vector.shape_cast %43 : vector<1x8x128xf32> to vector<8x128xf32>
    %45 = vector.shape_cast %41 : vector<8x128xf32> to vector<1x8x128xf32>
    tpu.vector_store %arg5[%42, %c0_18, %c0_19], %45 {strides = array<i32>} : memref<8x8x128xf32, #tpu.memory_space<vmem>>, vector<1x8x128xf32>,
    %c1_i32 = arith.constant 1 : i32
    %46 = arith.index_cast %c1_i32 : i32 to index
    %c0_20 = arith.constant 0 : index
    %c0_21 = arith.constant 0 : index
    %47 = vector.load %arg1[%46, %c0_20, %c0_21] : memref<8x8x512xf32, #tpu.memory_space<vmem>>, vector<1x8x512xf32>
    %48 = vector.shape_cast %47 : vector<1x8x512xf32> to vector<8x512xf32>
    %cst_22 = arith.constant dense<0.000000e+00> : vector<8x512xf32>
    %49 = tpu.matmul %41, %3, %cst_22 {dimension_numbers = #tpu.dot_dimension_numbers<[1], [0], [0], [1], [0, 0, 1, 1], [], []>} : vector<8x128xf32>, vector<128x512xf32>, vector<8x512xf32> -> vector<8x512xf32>
    %50 = arith.addf %48, %49 : vector<8x512xf32>
    %51 = vector.extract_strided_slice %50 {offsets = [0, 0], sizes = [8, 128], strides = [1, 1]} : vector<8x512xf32> to vector<8x128xf32>
    %cst_23 = arith.constant 5.000000e-01 : f32
    %52 = vector.broadcast %cst_23 : f32 to vector<8x128xf32>
    %53 = arith.mulf %52, %51 : vector<8x128xf32>
    %54 = math.tanh %53 : vector<8x128xf32>
    %cst_24 = arith.constant 5.000000e-01 : f32
    %55 = vector.broadcast %cst_24 : f32 to vector<8x128xf32>
    %56 = arith.mulf %55, %54 : vector<8x128xf32>
    %cst_25 = arith.constant 5.000000e-01 : f32
    %57 = vector.broadcast %cst_25 : f32 to vector<8x128xf32>
    %58 = arith.addf %56, %57 : vector<8x128xf32>
    %59 = vector.extract_strided_slice %50 {offsets = [0, 128], sizes = [8, 128], strides = [1, 1]} : vector<8x512xf32> to vector<8x128xf32>
    %cst_26 = arith.constant 5.000000e-01 : f32
    %60 = vector.broadcast %cst_26 : f32 to vector<8x128xf32>
    %61 = arith.mulf %60, %59 : vector<8x128xf32>
    %62 = math.tanh %61 : vector<8x128xf32>
    %cst_27 = arith.constant 5.000000e-01 : f32
    %63 = vector.broadcast %cst_27 : f32 to vector<8x128xf32>
    %64 = arith.mulf %63, %62 : vector<8x128xf32>
    %cst_28 = arith.constant 5.000000e-01 : f32
    %65 = vector.broadcast %cst_28 : f32 to vector<8x128xf32>
    %66 = arith.addf %64, %65 : vector<8x128xf32>
    %67 = vector.extract_strided_slice %50 {offsets = [0, 256], sizes = [8, 128], strides = [1, 1]} : vector<8x512xf32> to vector<8x128xf32>
    %68 = math.tanh %67 : vector<8x128xf32>
    %69 = vector.extract_strided_slice %50 {offsets = [0, 384], sizes = [8, 128], strides = [1, 1]} : vector<8x512xf32> to vector<8x128xf32>
    %cst_29 = arith.constant 5.000000e-01 : f32
    %70 = vector.broadcast %cst_29 : f32 to vector<8x128xf32>
    %71 = arith.mulf %70, %69 : vector<8x128xf32>
    %72 = math.tanh %71 : vector<8x128xf32>
    %cst_30 = arith.constant 5.000000e-01 : f32
    %73 = vector.broadcast %cst_30 : f32 to vector<8x128xf32>
    %74 = arith.mulf %73, %72 : vector<8x128xf32>
    %cst_31 = arith.constant 5.000000e-01 : f32
    %75 = vector.broadcast %cst_31 : f32 to vector<8x128xf32>
    %76 = arith.addf %74, %75 : vector<8x128xf32>
    %77 = arith.mulf %66, %39 : vector<8x128xf32>
    %78 = arith.mulf %58, %68 : vector<8x128xf32>
    %79 = arith.addf %77, %78 : vector<8x128xf32>
    %80 = math.tanh %79 : vector<8x128xf32>
    %81 = arith.mulf %76, %80 : vector<8x128xf32>
    %82 = arith.index_cast %c1_i32 : i32 to index
    %c0_32 = arith.constant 0 : index
    %c0_33 = arith.constant 0 : index
    %83 = vector.load %arg5[%82, %c0_32, %c0_33] : memref<8x8x128xf32, #tpu.memory_space<vmem>>, vector<1x8x128xf32>
    %84 = vector.shape_cast %83 : vector<1x8x128xf32> to vector<8x128xf32>
    %85 = vector.shape_cast %81 : vector<8x128xf32> to vector<1x8x128xf32>
    tpu.vector_store %arg5[%82, %c0_32, %c0_33], %85 {strides = array<i32>} : memref<8x8x128xf32, #tpu.memory_space<vmem>>, vector<1x8x128xf32>,
    %c2_i32 = arith.constant 2 : i32
    %86 = arith.index_cast %c2_i32 : i32 to index
    %c0_34 = arith.constant 0 : index
    %c0_35 = arith.constant 0 : index
    %87 = vector.load %arg1[%86, %c0_34, %c0_35] : memref<8x8x512xf32, #tpu.memory_space<vmem>>, vector<1x8x512xf32>
    %88 = vector.shape_cast %87 : vector<1x8x512xf32> to vector<8x512xf32>
    %cst_36 = arith.constant dense<0.000000e+00> : vector<8x512xf32>
    %89 = tpu.matmul %81, %3, %cst_36 {dimension_numbers = #tpu.dot_dimension_numbers<[1], [0], [0], [1], [0, 0, 1, 1], [], []>} : vector<8x128xf32>, vector<128x512xf32>, vector<8x512xf32> -> vector<8x512xf32>
    %90 = arith.addf %88, %89 : vector<8x512xf32>
    %91 = vector.extract_strided_slice %90 {offsets = [0, 0], sizes = [8, 128], strides = [1, 1]} : vector<8x512xf32> to vector<8x128xf32>
    %cst_37 = arith.constant 5.000000e-01 : f32
    %92 = vector.broadcast %cst_37 : f32 to vector<8x128xf32>
    %93 = arith.mulf %92, %91 : vector<8x128xf32>
    %94 = math.tanh %93 : vector<8x128xf32>
    %cst_38 = arith.constant 5.000000e-01 : f32
    %95 = vector.broadcast %cst_38 : f32 to vector<8x128xf32>
    %96 = arith.mulf %95, %94 : vector<8x128xf32>
    %cst_39 = arith.constant 5.000000e-01 : f32
    %97 = vector.broadcast %cst_39 : f32 to vector<8x128xf32>
    %98 = arith.addf %96, %97 : vector<8x128xf32>
    %99 = vector.extract_strided_slice %90 {offsets = [0, 128], sizes = [8, 128], strides = [1, 1]} : vector<8x512xf32> to vector<8x128xf32>
    %cst_40 = arith.constant 5.000000e-01 : f32
    %100 = vector.broadcast %cst_40 : f32 to vector<8x128xf32>
    %101 = arith.mulf %100, %99 : vector<8x128xf32>
    %102 = math.tanh %101 : vector<8x128xf32>
    %cst_41 = arith.constant 5.000000e-01 : f32
    %103 = vector.broadcast %cst_41 : f32 to vector<8x128xf32>
    %104 = arith.mulf %103, %102 : vector<8x128xf32>
    %cst_42 = arith.constant 5.000000e-01 : f32
    %105 = vector.broadcast %cst_42 : f32 to vector<8x128xf32>
    %106 = arith.addf %104, %105 : vector<8x128xf32>
    %107 = vector.extract_strided_slice %90 {offsets = [0, 256], sizes = [8, 128], strides = [1, 1]} : vector<8x512xf32> to vector<8x128xf32>
    %108 = math.tanh %107 : vector<8x128xf32>
    %109 = vector.extract_strided_slice %90 {offsets = [0, 384], sizes = [8, 128], strides = [1, 1]} : vector<8x512xf32> to vector<8x128xf32>
    %cst_43 = arith.constant 5.000000e-01 : f32
    %110 = vector.broadcast %cst_43 : f32 to vector<8x128xf32>
    %111 = arith.mulf %110, %109 : vector<8x128xf32>
    %112 = math.tanh %111 : vector<8x128xf32>
    %cst_44 = arith.constant 5.000000e-01 : f32
    %113 = vector.broadcast %cst_44 : f32 to vector<8x128xf32>
    %114 = arith.mulf %113, %112 : vector<8x128xf32>
    %cst_45 = arith.constant 5.000000e-01 : f32
    %115 = vector.broadcast %cst_45 : f32 to vector<8x128xf32>
    %116 = arith.addf %114, %115 : vector<8x128xf32>
    %117 = arith.mulf %106, %79 : vector<8x128xf32>
    %118 = arith.mulf %98, %108 : vector<8x128xf32>
    %119 = arith.addf %117, %118 : vector<8x128xf32>
    %120 = math.tanh %119 : vector<8x128xf32>
    %121 = arith.mulf %116, %120 : vector<8x128xf32>
    %122 = arith.index_cast %c2_i32 : i32 to index
    %c0_46 = arith.constant 0 : index
    %c0_47 = arith.constant 0 : index
    %123 = vector.load %arg5[%122, %c0_46, %c0_47] : memref<8x8x128xf32, #tpu.memory_space<vmem>>, vector<1x8x128xf32>
    %124 = vector.shape_cast %123 : vector<1x8x128xf32> to vector<8x128xf32>
    %125 = vector.shape_cast %121 : vector<8x128xf32> to vector<1x8x128xf32>
    tpu.vector_store %arg5[%122, %c0_46, %c0_47], %125 {strides = array<i32>} : memref<8x8x128xf32, #tpu.memory_space<vmem>>, vector<1x8x128xf32>,
    %c3_i32 = arith.constant 3 : i32
    %126 = arith.index_cast %c3_i32 : i32 to index
    %c0_48 = arith.constant 0 : index
    %c0_49 = arith.constant 0 : index
    %127 = vector.load %arg1[%126, %c0_48, %c0_49] : memref<8x8x512xf32, #tpu.memory_space<vmem>>, vector<1x8x512xf32>
    %128 = vector.shape_cast %127 : vector<1x8x512xf32> to vector<8x512xf32>
    %cst_50 = arith.constant dense<0.000000e+00> : vector<8x512xf32>
    %129 = tpu.matmul %121, %3, %cst_50 {dimension_numbers = #tpu.dot_dimension_numbers<[1], [0], [0], [1], [0, 0, 1, 1], [], []>} : vector<8x128xf32>, vector<128x512xf32>, vector<8x512xf32> -> vector<8x512xf32>
    %130 = arith.addf %128, %129 : vector<8x512xf32>
    %131 = vector.extract_strided_slice %130 {offsets = [0, 0], sizes = [8, 128], strides = [1, 1]} : vector<8x512xf32> to vector<8x128xf32>
    %cst_51 = arith.constant 5.000000e-01 : f32
    %132 = vector.broadcast %cst_51 : f32 to vector<8x128xf32>
    %133 = arith.mulf %132, %131 : vector<8x128xf32>
    %134 = math.tanh %133 : vector<8x128xf32>
    %cst_52 = arith.constant 5.000000e-01 : f32
    %135 = vector.broadcast %cst_52 : f32 to vector<8x128xf32>
    %136 = arith.mulf %135, %134 : vector<8x128xf32>
    %cst_53 = arith.constant 5.000000e-01 : f32
    %137 = vector.broadcast %cst_53 : f32 to vector<8x128xf32>
    %138 = arith.addf %136, %137 : vector<8x128xf32>
    %139 = vector.extract_strided_slice %130 {offsets = [0, 128], sizes = [8, 128], strides = [1, 1]} : vector<8x512xf32> to vector<8x128xf32>
    %cst_54 = arith.constant 5.000000e-01 : f32
    %140 = vector.broadcast %cst_54 : f32 to vector<8x128xf32>
    %141 = arith.mulf %140, %139 : vector<8x128xf32>
    %142 = math.tanh %141 : vector<8x128xf32>
    %cst_55 = arith.constant 5.000000e-01 : f32
    %143 = vector.broadcast %cst_55 : f32 to vector<8x128xf32>
    %144 = arith.mulf %143, %142 : vector<8x128xf32>
    %cst_56 = arith.constant 5.000000e-01 : f32
    %145 = vector.broadcast %cst_56 : f32 to vector<8x128xf32>
    %146 = arith.addf %144, %145 : vector<8x128xf32>
    %147 = vector.extract_strided_slice %130 {offsets = [0, 256], sizes = [8, 128], strides = [1, 1]} : vector<8x512xf32> to vector<8x128xf32>
    %148 = math.tanh %147 : vector<8x128xf32>
    %149 = vector.extract_strided_slice %130 {offsets = [0, 384], sizes = [8, 128], strides = [1, 1]} : vector<8x512xf32> to vector<8x128xf32>
    %cst_57 = arith.constant 5.000000e-01 : f32
    %150 = vector.broadcast %cst_57 : f32 to vector<8x128xf32>
    %151 = arith.mulf %150, %149 : vector<8x128xf32>
    %152 = math.tanh %151 : vector<8x128xf32>
    %cst_58 = arith.constant 5.000000e-01 : f32
    %153 = vector.broadcast %cst_58 : f32 to vector<8x128xf32>
    %154 = arith.mulf %153, %152 : vector<8x128xf32>
    %cst_59 = arith.constant 5.000000e-01 : f32
    %155 = vector.broadcast %cst_59 : f32 to vector<8x128xf32>
    %156 = arith.addf %154, %155 : vector<8x128xf32>
    %157 = arith.mulf %146, %119 : vector<8x128xf32>
    %158 = arith.mulf %138, %148 : vector<8x128xf32>
    %159 = arith.addf %157, %158 : vector<8x128xf32>
    %160 = math.tanh %159 : vector<8x128xf32>
    %161 = arith.mulf %156, %160 : vector<8x128xf32>
    %162 = arith.index_cast %c3_i32 : i32 to index
    %c0_60 = arith.constant 0 : index
    %c0_61 = arith.constant 0 : index
    %163 = vector.load %arg5[%162, %c0_60, %c0_61] : memref<8x8x128xf32, #tpu.memory_space<vmem>>, vector<1x8x128xf32>
    %164 = vector.shape_cast %163 : vector<1x8x128xf32> to vector<8x128xf32>
    %165 = vector.shape_cast %161 : vector<8x128xf32> to vector<1x8x128xf32>
    tpu.vector_store %arg5[%162, %c0_60, %c0_61], %165 {strides = array<i32>} : memref<8x8x128xf32, #tpu.memory_space<vmem>>, vector<1x8x128xf32>,
    %c4_i32 = arith.constant 4 : i32
    %166 = arith.index_cast %c4_i32 : i32 to index
    %c0_62 = arith.constant 0 : index
    %c0_63 = arith.constant 0 : index
    %167 = vector.load %arg1[%166, %c0_62, %c0_63] : memref<8x8x512xf32, #tpu.memory_space<vmem>>, vector<1x8x512xf32>
    %168 = vector.shape_cast %167 : vector<1x8x512xf32> to vector<8x512xf32>
    %cst_64 = arith.constant dense<0.000000e+00> : vector<8x512xf32>
    %169 = tpu.matmul %161, %3, %cst_64 {dimension_numbers = #tpu.dot_dimension_numbers<[1], [0], [0], [1], [0, 0, 1, 1], [], []>} : vector<8x128xf32>, vector<128x512xf32>, vector<8x512xf32> -> vector<8x512xf32>
    %170 = arith.addf %168, %169 : vector<8x512xf32>
    %171 = vector.extract_strided_slice %170 {offsets = [0, 0], sizes = [8, 128], strides = [1, 1]} : vector<8x512xf32> to vector<8x128xf32>
    %cst_65 = arith.constant 5.000000e-01 : f32
    %172 = vector.broadcast %cst_65 : f32 to vector<8x128xf32>
    %173 = arith.mulf %172, %171 : vector<8x128xf32>
    %174 = math.tanh %173 : vector<8x128xf32>
    %cst_66 = arith.constant 5.000000e-01 : f32
    %175 = vector.broadcast %cst_66 : f32 to vector<8x128xf32>
    %176 = arith.mulf %175, %174 : vector<8x128xf32>
    %cst_67 = arith.constant 5.000000e-01 : f32
    %177 = vector.broadcast %cst_67 : f32 to vector<8x128xf32>
    %178 = arith.addf %176, %177 : vector<8x128xf32>
    %179 = vector.extract_strided_slice %170 {offsets = [0, 128], sizes = [8, 128], strides = [1, 1]} : vector<8x512xf32> to vector<8x128xf32>
    %cst_68 = arith.constant 5.000000e-01 : f32
    %180 = vector.broadcast %cst_68 : f32 to vector<8x128xf32>
    %181 = arith.mulf %180, %179 : vector<8x128xf32>
    %182 = math.tanh %181 : vector<8x128xf32>
    %cst_69 = arith.constant 5.000000e-01 : f32
    %183 = vector.broadcast %cst_69 : f32 to vector<8x128xf32>
    %184 = arith.mulf %183, %182 : vector<8x128xf32>
    %cst_70 = arith.constant 5.000000e-01 : f32
    %185 = vector.broadcast %cst_70 : f32 to vector<8x128xf32>
    %186 = arith.addf %184, %185 : vector<8x128xf32>
    %187 = vector.extract_strided_slice %170 {offsets = [0, 256], sizes = [8, 128], strides = [1, 1]} : vector<8x512xf32> to vector<8x128xf32>
    %188 = math.tanh %187 : vector<8x128xf32>
    %189 = vector.extract_strided_slice %170 {offsets = [0, 384], sizes = [8, 128], strides = [1, 1]} : vector<8x512xf32> to vector<8x128xf32>
    %cst_71 = arith.constant 5.000000e-01 : f32
    %190 = vector.broadcast %cst_71 : f32 to vector<8x128xf32>
    %191 = arith.mulf %190, %189 : vector<8x128xf32>
    %192 = math.tanh %191 : vector<8x128xf32>
    %cst_72 = arith.constant 5.000000e-01 : f32
    %193 = vector.broadcast %cst_72 : f32 to vector<8x128xf32>
    %194 = arith.mulf %193, %192 : vector<8x128xf32>
    %cst_73 = arith.constant 5.000000e-01 : f32
    %195 = vector.broadcast %cst_73 : f32 to vector<8x128xf32>
    %196 = arith.addf %194, %195 : vector<8x128xf32>
    %197 = arith.mulf %186, %159 : vector<8x128xf32>
    %198 = arith.mulf %178, %188 : vector<8x128xf32>
    %199 = arith.addf %197, %198 : vector<8x128xf32>
    %200 = math.tanh %199 : vector<8x128xf32>
    %201 = arith.mulf %196, %200 : vector<8x128xf32>
    %202 = arith.index_cast %c4_i32 : i32 to index
    %c0_74 = arith.constant 0 : index
    %c0_75 = arith.constant 0 : index
    %203 = vector.load %arg5[%202, %c0_74, %c0_75] : memref<8x8x128xf32, #tpu.memory_space<vmem>>, vector<1x8x128xf32>
    %204 = vector.shape_cast %203 : vector<1x8x128xf32> to vector<8x128xf32>
    %205 = vector.shape_cast %201 : vector<8x128xf32> to vector<1x8x128xf32>
    tpu.vector_store %arg5[%202, %c0_74, %c0_75], %205 {strides = array<i32>} : memref<8x8x128xf32, #tpu.memory_space<vmem>>, vector<1x8x128xf32>,
    %c5_i32 = arith.constant 5 : i32
    %206 = arith.index_cast %c5_i32 : i32 to index
    %c0_76 = arith.constant 0 : index
    %c0_77 = arith.constant 0 : index
    %207 = vector.load %arg1[%206, %c0_76, %c0_77] : memref<8x8x512xf32, #tpu.memory_space<vmem>>, vector<1x8x512xf32>
    %208 = vector.shape_cast %207 : vector<1x8x512xf32> to vector<8x512xf32>
    %cst_78 = arith.constant dense<0.000000e+00> : vector<8x512xf32>
    %209 = tpu.matmul %201, %3, %cst_78 {dimension_numbers = #tpu.dot_dimension_numbers<[1], [0], [0], [1], [0, 0, 1, 1], [], []>} : vector<8x128xf32>, vector<128x512xf32>, vector<8x512xf32> -> vector<8x512xf32>
    %210 = arith.addf %208, %209 : vector<8x512xf32>
    %211 = vector.extract_strided_slice %210 {offsets = [0, 0], sizes = [8, 128], strides = [1, 1]} : vector<8x512xf32> to vector<8x128xf32>
    %cst_79 = arith.constant 5.000000e-01 : f32
    %212 = vector.broadcast %cst_79 : f32 to vector<8x128xf32>
    %213 = arith.mulf %212, %211 : vector<8x128xf32>
    %214 = math.tanh %213 : vector<8x128xf32>
    %cst_80 = arith.constant 5.000000e-01 : f32
    %215 = vector.broadcast %cst_80 : f32 to vector<8x128xf32>
    %216 = arith.mulf %215, %214 : vector<8x128xf32>
    %cst_81 = arith.constant 5.000000e-01 : f32
    %217 = vector.broadcast %cst_81 : f32 to vector<8x128xf32>
    %218 = arith.addf %216, %217 : vector<8x128xf32>
    %219 = vector.extract_strided_slice %210 {offsets = [0, 128], sizes = [8, 128], strides = [1, 1]} : vector<8x512xf32> to vector<8x128xf32>
    %cst_82 = arith.constant 5.000000e-01 : f32
    %220 = vector.broadcast %cst_82 : f32 to vector<8x128xf32>
    %221 = arith.mulf %220, %219 : vector<8x128xf32>
    %222 = math.tanh %221 : vector<8x128xf32>
    %cst_83 = arith.constant 5.000000e-01 : f32
    %223 = vector.broadcast %cst_83 : f32 to vector<8x128xf32>
    %224 = arith.mulf %223, %222 : vector<8x128xf32>
    %cst_84 = arith.constant 5.000000e-01 : f32
    %225 = vector.broadcast %cst_84 : f32 to vector<8x128xf32>
    %226 = arith.addf %224, %225 : vector<8x128xf32>
    %227 = vector.extract_strided_slice %210 {offsets = [0, 256], sizes = [8, 128], strides = [1, 1]} : vector<8x512xf32> to vector<8x128xf32>
    %228 = math.tanh %227 : vector<8x128xf32>
    %229 = vector.extract_strided_slice %210 {offsets = [0, 384], sizes = [8, 128], strides = [1, 1]} : vector<8x512xf32> to vector<8x128xf32>
    %cst_85 = arith.constant 5.000000e-01 : f32
    %230 = vector.broadcast %cst_85 : f32 to vector<8x128xf32>
    %231 = arith.mulf %230, %229 : vector<8x128xf32>
    %232 = math.tanh %231 : vector<8x128xf32>
    %cst_86 = arith.constant 5.000000e-01 : f32
    %233 = vector.broadcast %cst_86 : f32 to vector<8x128xf32>
    %234 = arith.mulf %233, %232 : vector<8x128xf32>
    %cst_87 = arith.constant 5.000000e-01 : f32
    %235 = vector.broadcast %cst_87 : f32 to vector<8x128xf32>
    %236 = arith.addf %234, %235 : vector<8x128xf32>
    %237 = arith.mulf %226, %199 : vector<8x128xf32>
    %238 = arith.mulf %218, %228 : vector<8x128xf32>
    %239 = arith.addf %237, %238 : vector<8x128xf32>
    %240 = math.tanh %239 : vector<8x128xf32>
    %241 = arith.mulf %236, %240 : vector<8x128xf32>
    %242 = arith.index_cast %c5_i32 : i32 to index
    %c0_88 = arith.constant 0 : index
    %c0_89 = arith.constant 0 : index
    %243 = vector.load %arg5[%242, %c0_88, %c0_89] : memref<8x8x128xf32, #tpu.memory_space<vmem>>, vector<1x8x128xf32>
    %244 = vector.shape_cast %243 : vector<1x8x128xf32> to vector<8x128xf32>
    %245 = vector.shape_cast %241 : vector<8x128xf32> to vector<1x8x128xf32>
    tpu.vector_store %arg5[%242, %c0_88, %c0_89], %245 {strides = array<i32>} : memref<8x8x128xf32, #tpu.memory_space<vmem>>, vector<1x8x128xf32>,
    %c6_i32 = arith.constant 6 : i32
    %246 = arith.index_cast %c6_i32 : i32 to index
    %c0_90 = arith.constant 0 : index
    %c0_91 = arith.constant 0 : index
    %247 = vector.load %arg1[%246, %c0_90, %c0_91] : memref<8x8x512xf32, #tpu.memory_space<vmem>>, vector<1x8x512xf32>
    %248 = vector.shape_cast %247 : vector<1x8x512xf32> to vector<8x512xf32>
    %cst_92 = arith.constant dense<0.000000e+00> : vector<8x512xf32>
    %249 = tpu.matmul %241, %3, %cst_92 {dimension_numbers = #tpu.dot_dimension_numbers<[1], [0], [0], [1], [0, 0, 1, 1], [], []>} : vector<8x128xf32>, vector<128x512xf32>, vector<8x512xf32> -> vector<8x512xf32>
    %250 = arith.addf %248, %249 : vector<8x512xf32>
    %251 = vector.extract_strided_slice %250 {offsets = [0, 0], sizes = [8, 128], strides = [1, 1]} : vector<8x512xf32> to vector<8x128xf32>
    %cst_93 = arith.constant 5.000000e-01 : f32
    %252 = vector.broadcast %cst_93 : f32 to vector<8x128xf32>
    %253 = arith.mulf %252, %251 : vector<8x128xf32>
    %254 = math.tanh %253 : vector<8x128xf32>
    %cst_94 = arith.constant 5.000000e-01 : f32
    %255 = vector.broadcast %cst_94 : f32 to vector<8x128xf32>
    %256 = arith.mulf %255, %254 : vector<8x128xf32>
    %cst_95 = arith.constant 5.000000e-01 : f32
    %257 = vector.broadcast %cst_95 : f32 to vector<8x128xf32>
    %258 = arith.addf %256, %257 : vector<8x128xf32>
    %259 = vector.extract_strided_slice %250 {offsets = [0, 128], sizes = [8, 128], strides = [1, 1]} : vector<8x512xf32> to vector<8x128xf32>
    %cst_96 = arith.constant 5.000000e-01 : f32
    %260 = vector.broadcast %cst_96 : f32 to vector<8x128xf32>
    %261 = arith.mulf %260, %259 : vector<8x128xf32>
    %262 = math.tanh %261 : vector<8x128xf32>
    %cst_97 = arith.constant 5.000000e-01 : f32
    %263 = vector.broadcast %cst_97 : f32 to vector<8x128xf32>
    %264 = arith.mulf %263, %262 : vector<8x128xf32>
    %cst_98 = arith.constant 5.000000e-01 : f32
    %265 = vector.broadcast %cst_98 : f32 to vector<8x128xf32>
    %266 = arith.addf %264, %265 : vector<8x128xf32>
    %267 = vector.extract_strided_slice %250 {offsets = [0, 256], sizes = [8, 128], strides = [1, 1]} : vector<8x512xf32> to vector<8x128xf32>
    %268 = math.tanh %267 : vector<8x128xf32>
    %269 = vector.extract_strided_slice %250 {offsets = [0, 384], sizes = [8, 128], strides = [1, 1]} : vector<8x512xf32> to vector<8x128xf32>
    %cst_99 = arith.constant 5.000000e-01 : f32
    %270 = vector.broadcast %cst_99 : f32 to vector<8x128xf32>
    %271 = arith.mulf %270, %269 : vector<8x128xf32>
    %272 = math.tanh %271 : vector<8x128xf32>
    %cst_100 = arith.constant 5.000000e-01 : f32
    %273 = vector.broadcast %cst_100 : f32 to vector<8x128xf32>
    %274 = arith.mulf %273, %272 : vector<8x128xf32>
    %cst_101 = arith.constant 5.000000e-01 : f32
    %275 = vector.broadcast %cst_101 : f32 to vector<8x128xf32>
    %276 = arith.addf %274, %275 : vector<8x128xf32>
    %277 = arith.mulf %266, %239 : vector<8x128xf32>
    %278 = arith.mulf %258, %268 : vector<8x128xf32>
    %279 = arith.addf %277, %278 : vector<8x128xf32>
    %280 = math.tanh %279 : vector<8x128xf32>
    %281 = arith.mulf %276, %280 : vector<8x128xf32>
    %282 = arith.index_cast %c6_i32 : i32 to index
    %c0_102 = arith.constant 0 : index
    %c0_103 = arith.constant 0 : index
    %283 = vector.load %arg5[%282, %c0_102, %c0_103] : memref<8x8x128xf32, #tpu.memory_space<vmem>>, vector<1x8x128xf32>
    %284 = vector.shape_cast %283 : vector<1x8x128xf32> to vector<8x128xf32>
    %285 = vector.shape_cast %281 : vector<8x128xf32> to vector<1x8x128xf32>
    tpu.vector_store %arg5[%282, %c0_102, %c0_103], %285 {strides = array<i32>} : memref<8x8x128xf32, #tpu.memory_space<vmem>>, vector<1x8x128xf32>,
    %c7_i32 = arith.constant 7 : i32
    %286 = arith.index_cast %c7_i32 : i32 to index
    %c0_104 = arith.constant 0 : index
    %c0_105 = arith.constant 0 : index
    %287 = vector.load %arg1[%286, %c0_104, %c0_105] : memref<8x8x512xf32, #tpu.memory_space<vmem>>, vector<1x8x512xf32>
    %288 = vector.shape_cast %287 : vector<1x8x512xf32> to vector<8x512xf32>
    %cst_106 = arith.constant dense<0.000000e+00> : vector<8x512xf32>
    %289 = tpu.matmul %281, %3, %cst_106 {dimension_numbers = #tpu.dot_dimension_numbers<[1], [0], [0], [1], [0, 0, 1, 1], [], []>} : vector<8x128xf32>, vector<128x512xf32>, vector<8x512xf32> -> vector<8x512xf32>
    %290 = arith.addf %288, %289 : vector<8x512xf32>
    %291 = vector.extract_strided_slice %290 {offsets = [0, 0], sizes = [8, 128], strides = [1, 1]} : vector<8x512xf32> to vector<8x128xf32>
    %cst_107 = arith.constant 5.000000e-01 : f32
    %292 = vector.broadcast %cst_107 : f32 to vector<8x128xf32>
    %293 = arith.mulf %292, %291 : vector<8x128xf32>
    %294 = math.tanh %293 : vector<8x128xf32>
    %cst_108 = arith.constant 5.000000e-01 : f32
    %295 = vector.broadcast %cst_108 : f32 to vector<8x128xf32>
    %296 = arith.mulf %295, %294 : vector<8x128xf32>
    %cst_109 = arith.constant 5.000000e-01 : f32
    %297 = vector.broadcast %cst_109 : f32 to vector<8x128xf32>
    %298 = arith.addf %296, %297 : vector<8x128xf32>
    %299 = vector.extract_strided_slice %290 {offsets = [0, 128], sizes = [8, 128], strides = [1, 1]} : vector<8x512xf32> to vector<8x128xf32>
    %cst_110 = arith.constant 5.000000e-01 : f32
    %300 = vector.broadcast %cst_110 : f32 to vector<8x128xf32>
    %301 = arith.mulf %300, %299 : vector<8x128xf32>
    %302 = math.tanh %301 : vector<8x128xf32>
    %cst_111 = arith.constant 5.000000e-01 : f32
    %303 = vector.broadcast %cst_111 : f32 to vector<8x128xf32>
    %304 = arith.mulf %303, %302 : vector<8x128xf32>
    %cst_112 = arith.constant 5.000000e-01 : f32
    %305 = vector.broadcast %cst_112 : f32 to vector<8x128xf32>
    %306 = arith.addf %304, %305 : vector<8x128xf32>
    %307 = vector.extract_strided_slice %290 {offsets = [0, 256], sizes = [8, 128], strides = [1, 1]} : vector<8x512xf32> to vector<8x128xf32>
    %308 = math.tanh %307 : vector<8x128xf32>
    %309 = vector.extract_strided_slice %290 {offsets = [0, 384], sizes = [8, 128], strides = [1, 1]} : vector<8x512xf32> to vector<8x128xf32>
    %cst_113 = arith.constant 5.000000e-01 : f32
    %310 = vector.broadcast %cst_113 : f32 to vector<8x128xf32>
    %311 = arith.mulf %310, %309 : vector<8x128xf32>
    %312 = math.tanh %311 : vector<8x128xf32>
    %cst_114 = arith.constant 5.000000e-01 : f32
    %313 = vector.broadcast %cst_114 : f32 to vector<8x128xf32>
    %314 = arith.mulf %313, %312 : vector<8x128xf32>
    %cst_115 = arith.constant 5.000000e-01 : f32
    %315 = vector.broadcast %cst_115 : f32 to vector<8x128xf32>
    %316 = arith.addf %314, %315 : vector<8x128xf32>
    %317 = arith.mulf %306, %279 : vector<8x128xf32>
    %318 = arith.mulf %298, %308 : vector<8x128xf32>
    %319 = arith.addf %317, %318 : vector<8x128xf32>
    %320 = math.tanh %319 : vector<8x128xf32>
    %321 = arith.mulf %316, %320 : vector<8x128xf32>
    %322 = arith.index_cast %c7_i32 : i32 to index
    %c0_116 = arith.constant 0 : index
    %c0_117 = arith.constant 0 : index
    %323 = vector.load %arg5[%322, %c0_116, %c0_117] : memref<8x8x128xf32, #tpu.memory_space<vmem>>, vector<1x8x128xf32>
    %324 = vector.shape_cast %323 : vector<1x8x128xf32> to vector<8x128xf32>
    %325 = vector.shape_cast %321 : vector<8x128xf32> to vector<1x8x128xf32>
    tpu.vector_store %arg5[%322, %c0_116, %c0_117], %325 {strides = array<i32>} : memref<8x8x128xf32, #tpu.memory_space<vmem>>, vector<1x8x128xf32>,
    %c8_i32 = arith.constant 8 : i32
    %c0_118 = arith.constant 0 : index
    %c0_119 = arith.constant 0 : index
    %326 = vector.load %arg6[%c0_118, %c0_119] : memref<8x128xf32, #tpu.memory_space<vmem>>, vector<8x128xf32>
    tpu.vector_store %arg6[%c0_118, %c0_119], %321 {strides = array<i32>} : memref<8x128xf32, #tpu.memory_space<vmem>>, vector<8x128xf32>,
    %c0_120 = arith.constant 0 : index
    %c0_121 = arith.constant 0 : index
    %327 = vector.load %arg7[%c0_120, %c0_121] : memref<8x128xf32, #tpu.memory_space<vmem>>, vector<8x128xf32>
    tpu.vector_store %arg7[%c0_120, %c0_121], %319 {strides = array<i32>} : memref<8x128xf32, #tpu.memory_space<vmem>>, vector<8x128xf32>,
    return
  }
  func.func @transform_0(%arg0: i32) -> (i32, i32, i32) {
    %c0_i32 = arith.constant 0 : i32
    %c0_i32_0 = arith.constant 0 : i32
    %c0_i32_1 = arith.constant 0 : i32
    return %arg0, %c0_i32, %c0_i32_0 : i32, i32, i32
  }
  func.func @transform_1(%arg0: i32) -> (i32, i32) {
    %c0_i32 = arith.constant 0 : i32
    %c0_i32_0 = arith.constant 0 : i32
    %c0_i32_1 = arith.constant 0 : i32
    return %c0_i32, %c0_i32_0 : i32, i32
  }
  func.func @transform_2(%arg0: i32) -> (i32, i32) {
    %c0_i32 = arith.constant 0 : i32
    %c0_i32_0 = arith.constant 0 : i32
    %c0_i32_1 = arith.constant 0 : i32
    return %c0_i32, %c0_i32_0 : i32, i32
  }
  func.func @transform_3(%arg0: i32) -> (i32, i32) {
    %c0_i32 = arith.constant 0 : i32
    %c0_i32_0 = arith.constant 0 : i32
    %c0_i32_1 = arith.constant 0 : i32
    return %c0_i32, %c0_i32_0 : i32, i32
  }
  func.func @transform_4(%arg0: i32) -> (i32, i32, i32) {
    %c0_i32 = arith.constant 0 : i32
    %c0_i32_0 = arith.constant 0 : i32
    %c0_i32_1 = arith.constant 0 : i32
    return %arg0, %c0_i32, %c0_i32_0 : i32, i32, i32
  }
  func.func @transform_5(%arg0: i32) -> (i32, i32) {
    %c0_i32 = arith.constant 0 : i32
    %c0_i32_0 = arith.constant 0 : i32
    %c0_i32_1 = arith.constant 0 : i32
    return %c0_i32, %c0_i32_0 : i32, i32
  }
  func.func @transform_6(%arg0: i32) -> (i32, i32) {
    %c0_i32 = arith.constant 0 : i32
    %c0_i32_0 = arith.constant 0 : i32
    %c0_i32_1 = arith.constant 0 : i32
    return %c0_i32, %c0_i32_0 : i32, i32
  }
}

module attributes {stable_mosaic.version = 11 : i64} {
  func.func @_matmul_bias_kernel(%arg0: i32, %arg1: i32, %arg2: memref<64x128xf32, #tpu.memory_space<vmem>>, %arg3: memref<128x128xf32, #tpu.memory_space<vmem>>, %arg4: memref<1x128xf32, #tpu.memory_space<vmem>>, %arg5: memref<64x128xf32, #tpu.memory_space<vmem>>) attributes {dimension_semantics = [#tpu.dimension_semantics<parallel>, #tpu.dimension_semantics<parallel>], iteration_bounds = array<i64: 1, 1>, scalar_prefetch = 0 : i64, scratch_operands = 0 : i64, tpu.core_type = #tpu.core_type<tc>, window_params = [{transform_indices = @transform_0, window_bounds = array<i64: 64, 128>}, {transform_indices = @transform_1, window_bounds = array<i64: 128, 128>}, {transform_indices = @transform_2, window_bounds = array<i64: 1, 128>}, {transform_indices = @transform_3, window_bounds = array<i64: 64, 128>}]} {
    %c0 = arith.constant 0 : index
    %c0_0 = arith.constant 0 : index
    %0 = vector.load %arg2[%c0, %c0_0] : memref<64x128xf32, #tpu.memory_space<vmem>>, vector<64x128xf32>
    %c0_1 = arith.constant 0 : index
    %c0_2 = arith.constant 0 : index
    %1 = vector.load %arg3[%c0_1, %c0_2] : memref<128x128xf32, #tpu.memory_space<vmem>>, vector<128x128xf32>
    %cst = arith.constant dense<0.000000e+00> : vector<64x128xf32>
    %2 = tpu.matmul %0, %1, %cst {dimension_numbers = #tpu.dot_dimension_numbers<[1], [0], [0], [1], [0, 0, 1, 1], [], []>} : vector<64x128xf32>, vector<128x128xf32>, vector<64x128xf32> -> vector<64x128xf32>
    %c0_3 = arith.constant 0 : index
    %c0_4 = arith.constant 0 : index
    %3 = vector.load %arg4[%c0_3, %c0_4] : memref<1x128xf32, #tpu.memory_space<vmem>>, vector<1x128xf32>
    %4 = vector.broadcast %3 : vector<1x128xf32> to vector<64x128xf32>
    %5 = arith.addf %2, %4 : vector<64x128xf32>
    %c0_5 = arith.constant 0 : index
    %c0_6 = arith.constant 0 : index
    %6 = vector.load %arg5[%c0_5, %c0_6] : memref<64x128xf32, #tpu.memory_space<vmem>>, vector<64x128xf32>
    tpu.vector_store %arg5[%c0_5, %c0_6], %5 {strides = array<i32>} : memref<64x128xf32, #tpu.memory_space<vmem>>, vector<64x128xf32>,
    return
  }
  func.func @transform_0(%arg0: i32, %arg1: i32) -> (i32, i32) {
    %c0_i32 = arith.constant 0 : i32
    %c0_i32_0 = arith.constant 0 : i32
    return %arg0, %c0_i32 : i32, i32
  }
  func.func @transform_1(%arg0: i32, %arg1: i32) -> (i32, i32) {
    %c0_i32 = arith.constant 0 : i32
    %c0_i32_0 = arith.constant 0 : i32
    return %c0_i32, %arg1 : i32, i32
  }
  func.func @transform_2(%arg0: i32, %arg1: i32) -> (i32, i32) {
    %c0_i32 = arith.constant 0 : i32
    %c0_i32_0 = arith.constant 0 : i32
    return %c0_i32, %arg1 : i32, i32
  }
  func.func @transform_3(%arg0: i32, %arg1: i32) -> (i32, i32) {
    %c0_i32 = arith.constant 0 : i32
    return %arg0, %arg1 : i32, i32
  }
}

</mosaic_0001>

<llo_original>
// kernel: decoder_forward.5
$region0: #{decoder_forward.5}
  #allocation0 [shape = 'u32[]', space=smem, size = 0x4, offset = 0x4, fixed_abs, tag = 'smem constant byte address 0x4 - core index']
  #allocation1 [shape = 'u32[144,128]{1,0:T(1,128)}', space=vmem, size = 0x12000, scoped, tag = 'internal scratch']
  %s0 = inlined_call_operand.vmem [shape: f32[64,128], index: 0, kind: input, shape index: {}]
  %s1 = inlined_call_operand.vmem [shape: f32[128,128], index: 1, kind: input, shape index: {}]
  %s2 = inlined_call_operand.vmem [shape: f32[1,128], index: 2, kind: input, shape index: {}]
  %s3 = inlined_call_operand.vmem [shape: f32[64,128], index: 3, kind: output, shape index: {}]
  %s4 = sld [smem:[#allocation0]]
  $region22: #{decoder_forward.5} parent=0
    _
  %s6 = ssub.s32 1, %s4
  %s7 = scalar_select 0, %s6, %s4
  // Predicated region
  $region2: #{decoder_forward.5} parent=0 // pred_check
    _
  $region3: #{decoder_forward.5} parent=0 // pred_check_branch
    %9 = sbr.rel (0) target = $region5
  $region4: #{decoder_forward.5} parent=0 // pred_region
    _
  $region5: #{decoder_forward.5} parent=0 // pred_fallthru
    _
  // Predicated region
  $region6: #{decoder_forward.5} parent=0 // pred_check
    _
  $region7: #{decoder_forward.5} parent=0 // pred_check_branch
    %11 = sbr.rel (0) target = $region9
  $region8: #{decoder_forward.5} parent=0 // pred_region
    _
  $region9: #{decoder_forward.5} parent=0 // pred_fallthru
    _
  // Predicated region
  $region10: #{decoder_forward.5} parent=0 // pred_check
    _
  $region11: #{decoder_forward.5} parent=0 // pred_check_branch
    %13 = sbr.rel (0) target = $region13
  $region12: #{decoder_forward.5} parent=0 // pred_region
    _
  $region13: #{decoder_forward.5} parent=0 // pred_fallthru
    _
  %v14 = vld [vmem:[%s0] sm:$0xff]
  %v15 = vld [vmem:[%s0 + $0x8] sm:$0xff]
  %v16 = vld [vmem:[%s0 + $0x10] sm:$0xff]
  %v17 = vld [vmem:[%s0 + $0x18] sm:$0xff]
  %v18 = vld [vmem:[%s0 + $0x20] sm:$0xff]
  %v19 = vld [vmem:[%s0 + $0x28] sm:$0xff]
  %v20 = vld [vmem:[%s0 + $0x30] sm:$0xff]
  %v21 = vld [vmem:[%s0 + $0x38] sm:$0xff]
  %v22 = vld [vmem:[%s1] sm:$0xff]
  %v23 = vld [vmem:[%s1 + $0x8] sm:$0xff]
  %v24 = vld [vmem:[%s1 + $0x10] sm:$0xff]
  %v25 = vld [vmem:[%s1 + $0x18] sm:$0xff]
  %v26 = vld [vmem:[%s1 + $0x20] sm:$0xff]
  %v27 = vld [vmem:[%s1 + $0x28] sm:$0xff]
  %v28 = vld [vmem:[%s1 + $0x30] sm:$0xff]
  %v29 = vld [vmem:[%s1 + $0x38] sm:$0xff]
  %v30 = vld [vmem:[%s1 + $0x40] sm:$0xff]
  %v31 = vld [vmem:[%s1 + $0x48] sm:$0xff]
  %v32 = vld [vmem:[%s1 + $0x50] sm:$0xff]
  %v33 = vld [vmem:[%s1 + $0x58] sm:$0xff]
  %v34 = vld [vmem:[%s1 + $0x60] sm:$0xff]
  %v35 = vld [vmem:[%s1 + $0x68] sm:$0xff]
  %v36 = vld [vmem:[%s1 + $0x70] sm:$0xff]
  %v37 = vld [vmem:[%s1 + $0x78] sm:$0xff]
  %v38 = vld [vmem:[%s2] sm:$0x1]
  %v40 = vlaneseq
  %v41 = vshrl.u32 %v40, 7
  %v42 = vsub.s32 0, %v41
  %v43 = vrot.slane %v38, %v42
  %45 = vmatprep.subr.mxu0 0.0
  %46 = vmatpush1.msra.mxu0 %v37
  %47 = vmatprep.subr.mxu0 0.0
  %48 = vmatpush1.msra.mxu0 %v36
  %49 = vmatprep.subr.mxu0 0.0
  %50 = vmatpush1.msra.mxu0 %v35
  %51 = vmatprep.subr.mxu0 0.0
  %52 = vmatpush1.msra.mxu0 %v34
  %53 = vmatprep.subr.mxu0 0.0
  %54 = vmatpush1.msra.mxu0 %v33
  %55 = vmatprep.subr.mxu0 0.0
  %56 = vmatpush1.msra.mxu0 %v32
  %57 = vmatprep.subr.mxu0 0.0
  %58 = vmatpush1.msra.mxu0 %v31
  %59 = vmatprep.subr.mxu0 0.0
  %60 = vmatpush1.msra.mxu0 %v30
  %61 = vmatprep.subr.mxu0 0.0
  %62 = vmatpush1.msra.mxu0 %v29
  %63 = vmatprep.subr.mxu0 0.0
  %64 = vmatpush1.msra.mxu0 %v28
  %65 = vmatprep.subr.mxu0 0.0
  %66 = vmatpush1.msra.mxu0 %v27
  %67 = vmatprep.subr.mxu0 0.0
  %68 = vmatpush1.msra.mxu0 %v26
  %69 = vmatprep.subr.mxu0 0.0
  %70 = vmatpush1.msra.mxu0 %v25
  %71 = vmatprep.subr.mxu0 0.0
  %72 = vmatpush1.msra.mxu0 %v24
  %73 = vmatprep.subr.mxu0 0.0
  %74 = vmatpush1.msra.mxu0 %v23
  %75 = vmatprep.subr.mxu0 0.0
  %76 = vmatpush1.msra.mxu0 %v22
  %77 = vmatprep.subr.mxu0 0.0
  %78 = vmatpush2.msra.mxu0 0.0
  %79 = vmatprep.subr.mxu0 0.0
  %80 = vmatpush2.msra.mxu0 0.0
  %81 = vmatprep.subr.mxu0 0.0
  %82 = vmatpush2.msra.mxu0 0.0
  %83 = vmatprep.subr.mxu0 0.0
  %84 = vmatpush2.msra.mxu0 0.0
  %85 = vmatprep.subr.mxu0 0.0
  %86 = vmatpush2.msra.mxu0 0.0
  %87 = vmatprep.subr.mxu0 0.0
  %88 = vmatpush2.msra.mxu0 0.0
  %89 = vmatprep.subr.mxu0 0.0
  %90 = vmatpush2.msra.mxu0 0.0
  %91 = vmatprep.subr.mxu0 0.0
  %92 = vmatpush2.msra.mxu0 0.0
  %93 = vmatprep.subr.mxu0 0.0
  %94 = vmatpush2.msra.mxu0 0.0
  %95 = vmatprep.subr.mxu0 0.0
  %96 = vmatpush2.msra.mxu0 0.0
  %97 = vmatprep.subr.mxu0 0.0
  %98 = vmatpush2.msra.mxu0 0.0
  %99 = vmatprep.subr.mxu0 0.0
  %100 = vmatpush2.msra.mxu0 0.0
  %101 = vmatprep.subr.mxu0 0.0
  %102 = vmatpush2.msra.mxu0 0.0
  %103 = vmatprep.subr.mxu0 0.0
  %104 = vmatpush2.msra.mxu0 0.0
  %105 = vmatprep.subr.mxu0 0.0
  %106 = vmatpush2.msra.mxu0 0.0
  %107 = vmatprep.subr.mxu0 0.0
  %108 = vmatpush2.msra.mxu0 0.0
  %109 = vmatprep.mubr.f32.mxu0 0.0
  %110 = vmatmul.mubr.f32.gmra.mxu0 %v14
  %v111 = vpop.f32.mrf.mxu0
  %v112 = vadd.f32 %v43, %v111
  %v113 = vpop.f32.mrf.mxu0
  %114 = vmatprep.mubr.f32.mxu0 0.0
  %115 = vmatmul.mubr.f32.gmra.mxu0 %v15
  %v116 = vpop.f32.mrf.mxu0
  %v117 = vadd.f32 %v43, %v116
  %v118 = vpop.f32.mrf.mxu0
  %119 = vmatprep.mubr.f32.mxu0 0.0
  %120 = vmatmul.mubr.f32.gmra.mxu0 %v16
  %v121 = vpop.f32.mrf.mxu0
  %v122 = vadd.f32 %v43, %v121
  %v123 = vpop.f32.mrf.mxu0
  %124 = vmatprep.mubr.f32.mxu0 0.0
  %125 = vmatmul.mubr.f32.gmra.mxu0 %v17
  %v126 = vpop.f32.mrf.mxu0
  %v127 = vadd.f32 %v43, %v126
  %v128 = vpop.f32.mrf.mxu0
  %129 = vmatprep.mubr.f32.mxu0 0.0
  %130 = vmatmul.mubr.f32.gmra.mxu0 %v18
  %v131 = vpop.f32.mrf.mxu0
  %v132 = vadd.f32 %v43, %v131
  %v133 = vpop.f32.mrf.mxu0
  %134 = vmatprep.mubr.f32.mxu0 0.0
  %135 = vmatmul.mubr.f32.gmra.mxu0 %v19
  %v136 = vpop.f32.mrf.mxu0
  %v137 = vadd.f32 %v43, %v136
  %v138 = vpop.f32.mrf.mxu0
  %139 = vmatprep.mubr.f32.mxu0 0.0
  %140 = vmatmul.mubr.f32.gmra.mxu0 %v20
  %v141 = vpop.f32.mrf.mxu0
  %v142 = vadd.f32 %v43, %v141
  %v143 = vpop.f32.mrf.mxu0
  %144 = vmatprep.mubr.f32.mxu0 0.0
  %145 = vmatmul.mubr.f32.gmra.mxu0 %v21
  %v146 = vpop.f32.mrf.mxu0
  %v147 = vadd.f32 %v43, %v146
  %v148 = vpop.f32.mrf.mxu0
  %149 = vdwg.mxu0
  %150 = vst [vmem:[%s3] sm:$0xff] %v112
  %151 = vst [vmem:[%s3 + $0x8] sm:$0xff] %v117
  %152 = vst [vmem:[%s3 + $0x10] sm:$0xff] %v122
  %153 = vst [vmem:[%s3 + $0x18] sm:$0xff] %v127
  %154 = vst [vmem:[%s3 + $0x20] sm:$0xff] %v132
  %155 = vst [vmem:[%s3 + $0x28] sm:$0xff] %v137
  %156 = vst [vmem:[%s3 + $0x30] sm:$0xff] %v142
  %157 = vst [vmem:[%s3 + $0x38] sm:$0xff] %v147
  // Predicated region
  $region14: #{decoder_forward.5} parent=0 // pred_check
    _
  $region15: #{decoder_forward.5} parent=0 // pred_check_branch
    %159 = sbr.rel (0) target = $region17
  $region16: #{decoder_forward.5} parent=0 // pred_region
    _
  $region17: #{decoder_forward.5} parent=0 // pred_fallthru
    _
  // Predicated region
  $region18: #{decoder_forward.5} parent=0 // pred_check
    _
  $region19: #{decoder_forward.5} parent=0 // pred_check_branch
    %161 = sbr.rel (0) target = $region21
  $region20: #{decoder_forward.5} parent=0 // pred_region
    _
  $region21: #{decoder_forward.5} parent=0 // pred_fallthru
    _

// kernel: decoder_forward.3
$region0: #{decoder_forward.3}
  #allocation0 [shape = 'u32[]', space=smem, size = 0x4, offset = 0x4, fixed_abs, tag = 'smem constant byte address 0x4 - core index']
  #allocation1 [shape = 'u32[144,128]{1,0:T(1,128)}', space=vmem, size = 0x12000, scoped, tag = 'internal scratch']
  %s0 = inlined_call_operand.vmem [shape: f32[64,32], index: 0, kind: input, shape index: {}]
  %s1 = inlined_call_operand.vmem [shape: f32[32,512], index: 1, kind: input, shape index: {}]
  %s2 = inlined_call_operand.vmem [shape: f32[1,512], index: 2, kind: input, shape index: {}]
  %s3 = inlined_call_operand.vmem [shape: f32[64,512], index: 3, kind: output, shape index: {}]
  %s4 = sld [smem:[#allocation0]]
  $region22: #{decoder_forward.3} parent=0
    _
  %s6 = ssub.s32 1, %s4
  %s7 = scalar_select 0, %s6, %s4
  // Predicated region
  $region2: #{decoder_forward.3} parent=0 // pred_check
    _
  $region3: #{decoder_forward.3} parent=0 // pred_check_branch
    %9 = sbr.rel (0) target = $region5
  $region4: #{decoder_forward.3} parent=0 // pred_region
    _
  $region5: #{decoder_forward.3} parent=0 // pred_fallthru
    _
  // Predicated region
  $region6: #{decoder_forward.3} parent=0 // pred_check
    _
  $region7: #{decoder_forward.3} parent=0 // pred_check_branch
    %11 = sbr.rel (0) target = $region9
  $region8: #{decoder_forward.3} parent=0 // pred_region
    _
  $region9: #{decoder_forward.3} parent=0 // pred_fallthru
    _
  // Predicated region
  $region10: #{decoder_forward.3} parent=0 // pred_check
    _
  $region11: #{decoder_forward.3} parent=0 // pred_check_branch
    %13 = sbr.rel (0) target = $region13
  $region12: #{decoder_forward.3} parent=0 // pred_region
    _
  $region13: #{decoder_forward.3} parent=0 // pred_fallthru
    _
  %v14 = vld [vmem:[%s0] sm:$0xff]
  %v15 = vld [vmem:[%s0 + $0x8] sm:$0xff]
  %v16 = vld [vmem:[%s0 + $0x10] sm:$0xff]
  %v17 = vld [vmem:[%s0 + $0x18] sm:$0xff]
  %v18 = vld [vmem:[%s0 + $0x20] sm:$0xff]
  %v19 = vld [vmem:[%s0 + $0x28] sm:$0xff]
  %v20 = vld [vmem:[%s0 + $0x30] sm:$0xff]
  %v21 = vld [vmem:[%s0 + $0x38] sm:$0xff]
  %v22 = vld [vmem:[%s1] sm:$0xff]
  %v23 = vld [vmem:[%s1 + $0x8] sm:$0xff]
  %v24 = vld [vmem:[%s1 + $0x10] sm:$0xff]
  %v25 = vld [vmem:[%s1 + $0x18] sm:$0xff]
  %v26 = vld [vmem:[%s1 + $0x20] sm:$0xff]
  %v27 = vld [vmem:[%s1 + $0x28] sm:$0xff]
  %v28 = vld [vmem:[%s1 + $0x30] sm:$0xff]
  %v29 = vld [vmem:[%s1 + $0x38] sm:$0xff]
  %v30 = vld [vmem:[%s1 + $0x40] sm:$0xff]
  %v31 = vld [vmem:[%s1 + $0x48] sm:$0xff]
  %v32 = vld [vmem:[%s1 + $0x50] sm:$0xff]
  %v33 = vld [vmem:[%s1 + $0x58] sm:$0xff]
  %v34 = vld [vmem:[%s1 + $0x60] sm:$0xff]
  %v35 = vld [vmem:[%s1 + $0x68] sm:$0xff]
  %v36 = vld [vmem:[%s1 + $0x70] sm:$0xff]
  %v37 = vld [vmem:[%s1 + $0x78] sm:$0xff]
  %v38 = vld [vmem:[%s2] sm:$0xf]
  %v40 = vlaneseq
  %v41 = vshrl.u32 %v40, 7
  %v42 = vsub.s32 0, %v41
  %v43 = vrot.slane %v38, %v42
  %v44 = vlaneseq
  %v45 = vshrl.u32 %v44, 7
  %v46 = vsub.s32 1, %v45
  %v47 = vrot.slane %v38, %v46
  %v48 = vlaneseq
  %v49 = vshrl.u32 %v48, 7
  %v50 = vsub.s32 2, %v49
  %v51 = vrot.slane %v38, %v50
  %v52 = vlaneseq
  %v53 = vshrl.u32 %v52, 7
  %v54 = vsub.s32 3, %v53
  %v55 = vrot.slane %v38, %v54
  %vm60 = vcmask 261120
  %v62 = vsel %vm60, %v14, 0
  %v65 = vsel %vm60, %v15, 0
  %v68 = vsel %vm60, %v16, 0
  %v71 = vsel %vm60, %v17, 0
  %v74 = vsel %vm60, %v18, 0
  %v77 = vsel %vm60, %v19, 0
  %v80 = vsel %vm60, %v20, 0
  %v83 = vsel %vm60, %v21, 0
  %85 = vmatprep.subr.mxu0 0.0
  %86 = vmatpush1.msra.mxu0 0.0
  %87 = vmatprep.subr.mxu0 0.0
  %88 = vmatpush1.msra.mxu0 0.0
  %89 = vmatprep.subr.mxu0 0.0
  %90 = vmatpush1.msra.mxu0 0.0
  %91 = vmatprep.subr.mxu0 0.0
  %92 = vmatpush1.msra.mxu0 0.0
  %93 = vmatprep.subr.mxu0 0.0
  %94 = vmatpush1.msra.mxu0 0.0
  %95 = vmatprep.subr.mxu0 0.0
  %96 = vmatpush1.msra.mxu0 0.0
  %97 = vmatprep.subr.mxu0 0.0
  %98 = vmatpush1.msra.mxu0 0.0
  %99 = vmatprep.subr.mxu0 0.0
  %100 = vmatpush1.msra.mxu0 0.0
  %101 = vmatprep.subr.mxu0 0.0
  %102 = vmatpush1.msra.mxu0 0.0
  %103 = vmatprep.subr.mxu0 0.0
  %104 = vmatpush1.msra.mxu0 0.0
  %105 = vmatprep.subr.mxu0 0.0
  %106 = vmatpush1.msra.mxu0 0.0
  %107 = vmatprep.subr.mxu0 0.0
  %108 = vmatpush1.msra.mxu0 0.0
  %109 = vmatprep.subr.mxu0 %v35
  %110 = vmatpush1.msra.mxu0 %v34
  %111 = vmatprep.subr.mxu0 %v31
  %112 = vmatpush1.msra.mxu0 %v30
  %113 = vmatprep.subr.mxu0 %v27
  %114 = vmatpush1.msra.mxu0 %v26
  %115 = vmatprep.subr.mxu0 %v23
  %116 = vmatpush1.msra.mxu0 %v22
  %117 = vmatprep.subr.mxu0 0.0
  %118 = vmatpush2.msra.mxu0 0.0
  %119 = vmatprep.subr.mxu0 0.0
  %120 = vmatpush2.msra.mxu0 0.0
  %121 = vmatprep.subr.mxu0 0.0
  %122 = vmatpush2.msra.mxu0 0.0
  %123 = vmatprep.subr.mxu0 0.0
  %124 = vmatpush2.msra.mxu0 0.0
  %125 = vmatprep.subr.mxu0 0.0
  %126 = vmatpush2.msra.mxu0 0.0
  %127 = vmatprep.subr.mxu0 0.0
  %128 = vmatpush2.msra.mxu0 0.0
  %129 = vmatprep.subr.mxu0 0.0
  %130 = vmatpush2.msra.mxu0 0.0
  %131 = vmatprep.subr.mxu0 0.0
  %132 = vmatpush2.msra.mxu0 0.0
  %133 = vmatprep.subr.mxu0 0.0
  %134 = vmatpush2.msra.mxu0 0.0
  %135 = vmatprep.subr.mxu0 0.0
  %136 = vmatpush2.msra.mxu0 0.0
  %137 = vmatprep.subr.mxu0 0.0
  %138 = vmatpush2.msra.mxu0 0.0
  %139 = vmatprep.subr.mxu0 0.0
  %140 = vmatpush2.msra.mxu0 0.0
  %141 = vmatprep.subr.mxu0 0.0
  %142 = vmatpush2.msra.mxu0 0.0
  %143 = vmatprep.subr.mxu0 0.0
  %144 = vmatpush2.msra.mxu0 0.0
  %145 = vmatprep.subr.mxu0 0.0
  %146 = vmatpush2.msra.mxu0 0.0
  %147 = vmatprep.subr.mxu0 0.0
  %148 = vmatpush2.msra.mxu0 0.0
  %149 = vmatprep.mubr.f32.mxu0 0.0
  %150 = vmatmul.mubr.f32.gmra.mxu0 %v62
  %v151 = vpop.f32.mrf.mxu0
  %v152 = vadd.f32 %v43, %v151
  %v153 = vpop.f32.mrf.mxu0
  %v154 = vadd.f32 %v47, %v153
  %155 = vmatprep.mubr.f32.mxu0 0.0
  %156 = vmatmul.mubr.f32.gmra.mxu0 %v65
  %v157 = vpop.f32.mrf.mxu0
  %v158 = vadd.f32 %v43, %v157
  %v159 = vpop.f32.mrf.mxu0
  %v160 = vadd.f32 %v47, %v159
  %161 = vmatprep.mubr.f32.mxu0 0.0
  %162 = vmatmul.mubr.f32.gmra.mxu0 %v68
  %v163 = vpop.f32.mrf.mxu0
  %v164 = vadd.f32 %v43, %v163
  %v165 = vpop.f32.mrf.mxu0
  %v166 = vadd.f32 %v47, %v165
  %167 = vmatprep.mubr.f32.mxu0 0.0
  %168 = vmatmul.mubr.f32.gmra.mxu0 %v71
  %v169 = vpop.f32.mrf.mxu0
  %v170 = vadd.f32 %v43, %v169
  %v171 = vpop.f32.mrf.mxu0
  %v172 = vadd.f32 %v47, %v171
  %173 = vmatprep.mubr.f32.mxu0 0.0
  %174 = vmatmul.mubr.f32.gmra.mxu0 %v74
  %v175 = vpop.f32.mrf.mxu0
  %v176 = vadd.f32 %v43, %v175
  %v177 = vpop.f32.mrf.mxu0
  %v178 = vadd.f32 %v47, %v177
  %179 = vmatprep.mubr.f32.mxu0 0.0
  %180 = vmatmul.mubr.f32.gmra.mxu0 %v77
  %v181 = vpop.f32.mrf.mxu0
  %v182 = vadd.f32 %v43, %v181
  %v183 = vpop.f32.mrf.mxu0
  %v184 = vadd.f32 %v47, %v183
  %185 = vmatprep.mubr.f32.mxu0 0.0
  %186 = vmatmul.mubr.f32.gmra.mxu0 %v80
  %v187 = vpop.f32.mrf.mxu0
  %v188 = vadd.f32 %v43, %v187
  %v189 = vpop.f32.mrf.mxu0
  %v190 = vadd.f32 %v47, %v189
  %191 = vmatprep.mubr.f32.mxu0 0.0
  %192 = vmatmul.mubr.f32.gmra.mxu0 %v83
  %v193 = vpop.f32.mrf.mxu0
  %v194 = vadd.f32 %v43, %v193
  %v195 = vpop.f32.mrf.mxu0
  %v196 = vadd.f32 %v47, %v195
  %197 = vdwg.mxu0
  %198 = vmatprep.subr.mxu0 0.0
  %199 = vmatpush1.msra.mxu0 0.0
  %200 = vmatprep.subr.mxu0 0.0
  %201 = vmatpush1.msra.mxu0 0.0
  %202 = vmatprep.subr.mxu0 0.0
  %203 = vmatpush1.msra.mxu0 0.0
  %204 = vmatprep.subr.mxu0 0.0
  %205 = vmatpush1.msra.mxu0 0.0
  %206 = vmatprep.subr.mxu0 0.0
  %207 = vmatpush1.msra.mxu0 0.0
  %208 = vmatprep.subr.mxu0 0.0
  %209 = vmatpush1.msra.mxu0 0.0
  %210 = vmatprep.subr.mxu0 0.0
  %211 = vmatpush1.msra.mxu0 0.0
  %212 = vmatprep.subr.mxu0 0.0
  %213 = vmatpush1.msra.mxu0 0.0
  %214 = vmatprep.subr.mxu0 0.0
  %215 = vmatpush1.msra.mxu0 0.0
  %216 = vmatprep.subr.mxu0 0.0
  %217 = vmatpush1.msra.mxu0 0.0
  %218 = vmatprep.subr.mxu0 0.0
  %219 = vmatpush1.msra.mxu0 0.0
  %220 = vmatprep.subr.mxu0 0.0
  %221 = vmatpush1.msra.mxu0 0.0
  %222 = vmatprep.subr.mxu0 %v37
  %223 = vmatpush1.msra.mxu0 %v36
  %224 = vmatprep.subr.mxu0 %v33
  %225 = vmatpush1.msra.mxu0 %v32
  %226 = vmatprep.subr.mxu0 %v29
  %227 = vmatpush1.msra.mxu0 %v28
  %228 = vmatprep.subr.mxu0 %v25
  %229 = vmatpush1.msra.mxu0 %v24
  %230 = vmatprep.subr.mxu0 0.0
  %231 = vmatpush2.msra.mxu0 0.0
  %232 = vmatprep.subr.mxu0 0.0
  %233 = vmatpush2.msra.mxu0 0.0
  %234 = vmatprep.subr.mxu0 0.0
  %235 = vmatpush2.msra.mxu0 0.0
  %236 = vmatprep.subr.mxu0 0.0
  %237 = vmatpush2.msra.mxu0 0.0
  %238 = vmatprep.subr.mxu0 0.0
  %239 = vmatpush2.msra.mxu0 0.0
  %240 = vmatprep.subr.mxu0 0.0
  %241 = vmatpush2.msra.mxu0 0.0
  %242 = vmatprep.subr.mxu0 0.0
  %243 = vmatpush2.msra.mxu0 0.0
  %244 = vmatprep.subr.mxu0 0.0
  %245 = vmatpush2.msra.mxu0 0.0
  %246 = vmatprep.subr.mxu0 0.0
  %247 = vmatpush2.msra.mxu0 0.0
  %248 = vmatprep.subr.mxu0 0.0
  %249 = vmatpush2.msra.mxu0 0.0
  %250 = vmatprep.subr.mxu0 0.0
  %251 = vmatpush2.msra.mxu0 0.0
  %252 = vmatprep.subr.mxu0 0.0
  %253 = vmatpush2.msra.mxu0 0.0
  %254 = vmatprep.subr.mxu0 0.0
  %255 = vmatpush2.msra.mxu0 0.0
  %256 = vmatprep.subr.mxu0 0.0
  %257 = vmatpush2.msra.mxu0 0.0
  %258 = vmatprep.subr.mxu0 0.0
  %259 = vmatpush2.msra.mxu0 0.0
  %260 = vmatprep.subr.mxu0 0.0
  %261 = vmatpush2.msra.mxu0 0.0
  %262 = vmatprep.mubr.f32.mxu0 0.0
  %263 = vmatmul.mubr.f32.gmra.mxu0 %v62
  %v264 = vpop.f32.mrf.mxu0
  %v265 = vadd.f32 %v51, %v264
  %v266 = vpop.f32.mrf.mxu0
  %v267 = vadd.f32 %v55, %v266
  %268 = vmatprep.mubr.f32.mxu0 0.0
  %269 = vmatmul.mubr.f32.gmra.mxu0 %v65
  %v270 = vpop.f32.mrf.mxu0
  %v271 = vadd.f32 %v51, %v270
  %v272 = vpop.f32.mrf.mxu0
  %v273 = vadd.f32 %v55, %v272
  %274 = vmatprep.mubr.f32.mxu0 0.0
  %275 = vmatmul.mubr.f32.gmra.mxu0 %v68
  %v276 = vpop.f32.mrf.mxu0
  %v277 = vadd.f32 %v51, %v276
  %v278 = vpop.f32.mrf.mxu0
  %v279 = vadd.f32 %v55, %v278
  %280 = vmatprep.mubr.f32.mxu0 0.0
  %281 = vmatmul.mubr.f32.gmra.mxu0 %v71
  %v282 = vpop.f32.mrf.mxu0
  %v283 = vadd.f32 %v51, %v282
  %v284 = vpop.f32.mrf.mxu0
  %v285 = vadd.f32 %v55, %v284
  %286 = vmatprep.mubr.f32.mxu0 0.0
  %287 = vmatmul.mubr.f32.gmra.mxu0 %v74
  %v288 = vpop.f32.mrf.mxu0
  %v289 = vadd.f32 %v51, %v288
  %v290 = vpop.f32.mrf.mxu0
  %v291 = vadd.f32 %v55, %v290
  %292 = vmatprep.mubr.f32.mxu0 0.0
  %293 = vmatmul.mubr.f32.gmra.mxu0 %v77
  %v294 = vpop.f32.mrf.mxu0
  %v295 = vadd.f32 %v51, %v294
  %v296 = vpop.f32.mrf.mxu0
  %v297 = vadd.f32 %v55, %v296
  %298 = vmatprep.mubr.f32.mxu0 0.0
  %299 = vmatmul.mubr.f32.gmra.mxu0 %v80
  %v300 = vpop.f32.mrf.mxu0
  %v301 = vadd.f32 %v51, %v300
  %v302 = vpop.f32.mrf.mxu0
  %v303 = vadd.f32 %v55, %v302
  %304 = vmatprep.mubr.f32.mxu0 0.0
  %305 = vmatmul.mubr.f32.gmra.mxu0 %v83
  %v306 = vpop.f32.mrf.mxu0
  %v307 = vadd.f32 %v51, %v306
  %v308 = vpop.f32.mrf.mxu0
  %v309 = vadd.f32 %v55, %v308
  %310 = vdwg.mxu0
  %311 = vst [vmem:[%s3] sm:$0xff] %v152
  %312 = vst [vmem:[%s3 + $0x8] sm:$0xff] %v154
  %313 = vst [vmem:[%s3 + $0x10] sm:$0xff] %v265
  %314 = vst [vmem:[%s3 + $0x18] sm:$0xff] %v267
  %315 = vst [vmem:[%s3 + $0x20] sm:$0xff] %v158
  %316 = vst [vmem:[%s3 + $0x28] sm:$0xff] %v160
  %317 = vst [vmem:[%s3 + $0x30] sm:$0xff] %v271
  %318 = vst [vmem:[%s3 + $0x38] sm:$0xff] %v273
  %319 = vst [vmem:[%s3 + $0x40] sm:$0xff] %v164
  %320 = vst [vmem:[%s3 + $0x48] sm:$0xff] %v166
  %321 = vst [vmem:[%s3 + $0x50] sm:$0xff] %v277
  %322 = vst [vmem:[%s3 + $0x58] sm:$0xff] %v279
  %323 = vst [vmem:[%s3 + $0x60] sm:$0xff] %v170
  %324 = vst [vmem:[%s3 + $0x68] sm:$0xff] %v172
  %325 = vst [vmem:[%s3 + $0x70] sm:$0xff] %v283
  %326 = vst [vmem:[%s3 + $0x78] sm:$0xff] %v285
  %327 = vst [vmem:[%s3 + $0x80] sm:$0xff] %v176
  %328 = vst [vmem:[%s3 + $0x88] sm:$0xff] %v178
  %329 = vst [vmem:[%s3 + $0x90] sm:$0xff] %v289
  %330 = vst [vmem:[%s3 + $0x98] sm:$0xff] %v291
  %331 = vst [vmem:[%s3 + $0xa0] sm:$0xff] %v182
  %332 = vst [vmem:[%s3 + $0xa8] sm:$0xff] %v184
  %333 = vst [vmem:[%s3 + $0xb0] sm:$0xff] %v295
  %334 = vst [vmem:[%s3 + $0xb8] sm:$0xff] %v297
  %335 = vst [vmem:[%s3 + $0xc0] sm:$0xff] %v188
  %336 = vst [vmem:[%s3 + $0xc8] sm:$0xff] %v190
  %337 = vst [vmem:[%s3 + $0xd0] sm:$0xff] %v301
  %338 = vst [vmem:[%s3 + $0xd8] sm:$0xff] %v303
  %339 = vst [vmem:[%s3 + $0xe0] sm:$0xff] %v194
  %340 = vst [vmem:[%s3 + $0xe8] sm:$0xff] %v196
  %341 = vst [vmem:[%s3 + $0xf0] sm:$0xff] %v307
  %342 = vst [vmem:[%s3 + $0xf8] sm:$0xff] %v309
  // Predicated region
  $region14: #{decoder_forward.3} parent=0 // pred_check
    _
  $region15: #{decoder_forward.3} parent=0 // pred_check_branch
    %344 = sbr.rel (0) target = $region17
  $region16: #{decoder_forward.3} parent=0 // pred_region
    _
  $region17: #{decoder_forward.3} parent=0 // pred_fallthru
    _
  // Predicated region
  $region18: #{decoder_forward.3} parent=0 // pred_check
    _
  $region19: #{decoder_forward.3} parent=0 // pred_check_branch
    %346 = sbr.rel (0) target = $region21
  $region20: #{decoder_forward.3} parent=0 // pred_region
    _
  $region21: #{decoder_forward.3} parent=0 // pred_fallthru
    _

// kernel: decoder_forward.4
$region0: #{decoder_forward.4}
  #allocation0 [shape = 'u32[]', space=smem, size = 0x4, offset = 0x4, fixed_abs, tag = 'smem constant byte address 0x4 - core index']
  #allocation1 [shape = 'u32[144,128]{1,0:T(1,128)}', space=vmem, size = 0x12000, scoped, tag = 'internal scratch']
  %s0 = inlined_call_operand.vmem [shape: f32[8,8,512], index: 0, kind: input, shape index: {}]
  %s1 = inlined_call_operand.vmem [shape: f32[128,512], index: 1, kind: input, shape index: {}]
  %s2 = inlined_call_operand.vmem [shape: f32[8,128], index: 2, kind: input, shape index: {}]
  %s3 = inlined_call_operand.vmem [shape: f32[8,128], index: 3, kind: input, shape index: {}]
  %s4 = inlined_call_operand.vmem [shape: f32[8,8,128], index: 4, kind: output, shape index: {0}]
  %s5 = inlined_call_operand.vmem [shape: f32[8,128], index: 5, kind: output, shape index: {1}]
  %s6 = inlined_call_operand.vmem [shape: f32[8,128], index: 6, kind: output, shape index: {2}]
  %7 = xla_tuple %s4, %s5, %s6
  %s8 = sld [smem:[#allocation0]]
  $region46: #{decoder_forward.4} parent=0
    _
  %s10 = ssub.s32 1, %s8
  %s11 = scalar_select 0, %s10, %s8
  // Predicated region
  $region2: #{decoder_forward.4} parent=0 // pred_check
    _
  $region3: #{decoder_forward.4} parent=0 // pred_check_branch
    %13 = sbr.rel (0) target = $region5
  $region4: #{decoder_forward.4} parent=0 // pred_region
    _
  $region5: #{decoder_forward.4} parent=0 // pred_fallthru
    _
  // Predicated region
  $region6: #{decoder_forward.4} parent=0 // pred_check
    _
  $region7: #{decoder_forward.4} parent=0 // pred_check_branch
    %15 = sbr.rel (0) target = $region9
  $region8: #{decoder_forward.4} parent=0 // pred_region
    _
  $region9: #{decoder_forward.4} parent=0 // pred_fallthru
    _
  // Predicated region
  $region10: #{decoder_forward.4} parent=0 // pred_check
    _
  $region11: #{decoder_forward.4} parent=0 // pred_check_branch
    %17 = sbr.rel (0) target = $region13
  $region12: #{decoder_forward.4} parent=0 // pred_region
    _
  $region13: #{decoder_forward.4} parent=0 // pred_fallthru
    _
  // Predicated region
  $region14: #{decoder_forward.4} parent=0 // pred_check
    _
  $region15: #{decoder_forward.4} parent=0 // pred_check_branch
    %19 = sbr.rel (0) target = $region17
  $region16: #{decoder_forward.4} parent=0 // pred_region
    _
  $region17: #{decoder_forward.4} parent=0 // pred_fallthru
    _
  %p20 = scmp.eq.s32.totalorder 0, 0
  // Predicated region
  $region18: #{decoder_forward.4} parent=0 // pred_check
    %p21 = pneg %p20
  $region19: #{decoder_forward.4} parent=0 // pred_check_branch
    %23 = sbr.rel (%p21) target = $region21
  $region20: #{decoder_forward.4} parent=0 // pred_region
    %v24 = vld [vmem:[%s2] sm:$0xff]
    %25 = vst [vmem:[%s5] sm:$0xff] %v24
    %v26 = vld [vmem:[%s3] sm:$0xff]
    %27 = vst [vmem:[%s6] sm:$0xff] %v26
  $region21: #{decoder_forward.4} parent=0 // pred_fallthru
    _
  %v28 = vld [vmem:[%s1] sm:$0xff]
  %v29 = vld [vmem:[%s1 + $0x8] sm:$0xff]
  %v30 = vld [vmem:[%s1 + $0x10] sm:$0xff]
  %v31 = vld [vmem:[%s1 + $0x18] sm:$0xff]
  %v32 = vld [vmem:[%s1 + $0x20] sm:$0xff]
  %v33 = vld [vmem:[%s1 + $0x28] sm:$0xff]
  %v34 = vld [vmem:[%s1 + $0x30] sm:$0xff]
  %v35 = vld [vmem:[%s1 + $0x38] sm:$0xff]
  %v36 = vld [vmem:[%s1 + $0x40] sm:$0xff]
  %v37 = vld [vmem:[%s1 + $0x48] sm:$0xff]
  %v38 = vld [vmem:[%s1 + $0x50] sm:$0xff]
  %v39 = vld [vmem:[%s1 + $0x58] sm:$0xff]
  %v40 = vld [vmem:[%s1 + $0x60] sm:$0xff]
  %v41 = vld [vmem:[%s1 + $0x68] sm:$0xff]
  %v42 = vld [vmem:[%s1 + $0x70] sm:$0xff]
  %v43 = vld [vmem:[%s1 + $0x78] sm:$0xff]
  %v44 = vld [vmem:[%s1 + $0x80] sm:$0xff]
  %v45 = vld [vmem:[%s1 + $0x88] sm:$0xff]
  %v46 = vld [vmem:[%s1 + $0x90] sm:$0xff]
  %v47 = vld [vmem:[%s1 + $0x98] sm:$0xff]
  %v48 = vld [vmem:[%s1 + $0xa0] sm:$0xff]
  %v49 = vld [vmem:[%s1 + $0xa8] sm:$0xff]
  %v50 = vld [vmem:[%s1 + $0xb0] sm:$0xff]
  %v51 = vld [vmem:[%s1 + $0xb8] sm:$0xff]
  %v52 = vld [vmem:[%s1 + $0xc0] sm:$0xff]
  %v53 = vld [vmem:[%s1 + $0xc8] sm:$0xff]
  %v54 = vld [vmem:[%s1 + $0xd0] sm:$0xff]
  %v55 = vld [vmem:[%s1 + $0xd8] sm:$0xff]
  %v56 = vld [vmem:[%s1 + $0xe0] sm:$0xff]
  %v57 = vld [vmem:[%s1 + $0xe8] sm:$0xff]
  %v58 = vld [vmem:[%s1 + $0xf0] sm:$0xff]
  %v59 = vld [vmem:[%s1 + $0xf8] sm:$0xff]
  %v60 = vld [vmem:[%s1 + $0x100] sm:$0xff]
  %v61 = vld [vmem:[%s1 + $0x108] sm:$0xff]
  %v62 = vld [vmem:[%s1 + $0x110] sm:$0xff]
  %v63 = vld [vmem:[%s1 + $0x118] sm:$0xff]
  %v64 = vld [vmem:[%s1 + $0x120] sm:$0xff]
  %v65 = vld [vmem:[%s1 + $0x128] sm:$0xff]
  %v66 = vld [vmem:[%s1 + $0x130] sm:$0xff]
  %v67 = vld [vmem:[%s1 + $0x138] sm:$0xff]
  %v68 = vld [vmem:[%s1 + $0x140] sm:$0xff]
  %v69 = vld [vmem:[%s1 + $0x148] sm:$0xff]
  %v70 = vld [vmem:[%s1 + $0x150] sm:$0xff]
  %v71 = vld [vmem:[%s1 + $0x158] sm:$0xff]
  %v72 = vld [vmem:[%s1 + $0x160] sm:$0xff]
  %v73 = vld [vmem:[%s1 + $0x168] sm:$0xff]
  %v74 = vld [vmem:[%s1 + $0x170] sm:$0xff]
  %v75 = vld [vmem:[%s1 + $0x178] sm:$0xff]
  %v76 = vld [vmem:[%s1 + $0x180] sm:$0xff]
  %v77 = vld [vmem:[%s1 + $0x188] sm:$0xff]
  %v78 = vld [vmem:[%s1 + $0x190] sm:$0xff]
  %v79 = vld [vmem:[%s1 + $0x198] sm:$0xff]
  %v80 = vld [vmem:[%s1 + $0x1a0] sm:$0xff]
  %v81 = vld [vmem:[%s1 + $0x1a8] sm:$0xff]
  %v82 = vld [vmem:[%s1 + $0x1b0] sm:$0xff]
  %v83 = vld [vmem:[%s1 + $0x1b8] sm:$0xff]
  %v84 = vld [vmem:[%s1 + $0x1c0] sm:$0xff]
  %v85 = vld [vmem:[%s1 + $0x1c8] sm:$0xff]
  %v86 = vld [vmem:[%s1 + $0x1d0] sm:$0xff]
  %v87 = vld [vmem:[%s1 + $0x1d8] sm:$0xff]
  %v88 = vld [vmem:[%s1 + $0x1e0] sm:$0xff]
  %v89 = vld [vmem:[%s1 + $0x1e8] sm:$0xff]
  %v90 = vld [vmem:[%s1 + $0x1f0] sm:$0xff]
  %v91 = vld [vmem:[%s1 + $0x1f8] sm:$0xff]
  %v92 = vld [vmem:[%s5] sm:$0xff]
  %v93 = vld [vmem:[%s6] sm:$0xff]
  %v94 = vld [vmem:[%s0] sm:$0xff]
  %v95 = vld [vmem:[%s0 + $0x8] sm:$0xff]
  %v96 = vld [vmem:[%s0 + $0x10] sm:$0xff]
  %v97 = vld [vmem:[%s0 + $0x18] sm:$0xff]
  %98 = vmatprep.subr.mxu0 %v89
  %99 = vmatpush1.msra.mxu0 %v88
  %100 = vmatprep.subr.mxu0 %v85
  %101 = vmatpush1.msra.mxu0 %v84
  %102 = vmatprep.subr.mxu0 %v81
  %103 = vmatpush1.msra.mxu0 %v80
  %104 = vmatprep.subr.mxu0 %v77
  %105 = vmatpush1.msra.mxu0 %v76
  %106 = vmatprep.subr.mxu0 %v73
  %107 = vmatpush1.msra.mxu0 %v72
  %108 = vmatprep.subr.mxu0 %v69
  %109 = vmatpush1.msra.mxu0 %v68
  %110 = vmatprep.subr.mxu0 %v65
  %111 = vmatpush1.msra.mxu0 %v64
  %112 = vmatprep.subr.mxu0 %v61
  %113 = vmatpush1.msra.mxu0 %v60
  %114 = vmatprep.subr.mxu0 %v57
  %115 = vmatpush1.msra.mxu0 %v56
  %116 = vmatprep.subr.mxu0 %v53
  %117 = vmatpush1.msra.mxu0 %v52
  %118 = vmatprep.subr.mxu0 %v49
  %119 = vmatpush1.msra.mxu0 %v48
  %120 = vmatprep.subr.mxu0 %v45
  %121 = vmatpush1.msra.mxu0 %v44
  %122 = vmatprep.subr.mxu0 %v41
  %123 = vmatpush1.msra.mxu0 %v40
  %124 = vmatprep.subr.mxu0 %v37
  %125 = vmatpush1.msra.mxu0 %v36
  %126 = vmatprep.subr.mxu0 %v33
  %127 = vmatpush1.msra.mxu0 %v32
  %128 = vmatprep.subr.mxu0 %v29
  %129 = vmatpush1.msra.mxu0 %v28
  %130 = vmatprep.subr.mxu0 0.0
  %131 = vmatpush2.msra.mxu0 0.0
  %132 = vmatprep.subr.mxu0 0.0
  %133 = vmatpush2.msra.mxu0 0.0
  %134 = vmatprep.subr.mxu0 0.0
  %135 = vmatpush2.msra.mxu0 0.0
  %136 = vmatprep.subr.mxu0 0.0
  %137 = vmatpush2.msra.mxu0 0.0
  %138 = vmatprep.subr.mxu0 0.0
  %139 = vmatpush2.msra.mxu0 0.0
  %140 = vmatprep.subr.mxu0 0.0
  %141 = vmatpush2.msra.mxu0 0.0
  %142 = vmatprep.subr.mxu0 0.0
  %143 = vmatpush2.msra.mxu0 0.0
  %144 = vmatprep.subr.mxu0 0.0
  %145 = vmatpush2.msra.mxu0 0.0
  %146 = vmatprep.subr.mxu0 0.0
  %147 = vmatpush2.msra.mxu0 0.0
  %148 = vmatprep.subr.mxu0 0.0
  %149 = vmatpush2.msra.mxu0 0.0
  %150 = vmatprep.subr.mxu0 0.0
  %151 = vmatpush2.msra.mxu0 0.0
  %152 = vmatprep.subr.mxu0 0.0
  %153 = vmatpush2.msra.mxu0 0.0
  %154 = vmatprep.subr.mxu0 0.0
  %155 = vmatpush2.msra.mxu0 0.0
  %156 = vmatprep.subr.mxu0 0.0
  %157 = vmatpush2.msra.mxu0 0.0
  %158 = vmatprep.subr.mxu0 0.0
  %159 = vmatpush2.msra.mxu0 0.0
  %160 = vmatprep.subr.mxu0 0.0
  %161 = vmatpush2.msra.mxu0 0.0
  %162 = vmatprep.mubr.f32.mxu0 0.0
  %163 = vmatmul.mubr.f32.gmra.mxu0 %v92
  %v164 = vpop.f32.mrf.mxu0
  %v165 = vadd.f32 0.0, %v164
  %v166 = vpop.f32.mrf.mxu0
  %v167 = vadd.f32 0.0, %v166
  %168 = vdwg.mxu0
  %169 = vmatprep.subr.mxu0 %v91
  %170 = vmatpush1.msra.mxu0 %v90
  %171 = vmatprep.subr.mxu0 %v87
  %172 = vmatpush1.msra.mxu0 %v86
  %173 = vmatprep.subr.mxu0 %v83
  %174 = vmatpush1.msra.mxu0 %v82
  %175 = vmatprep.subr.mxu0 %v79
  %176 = vmatpush1.msra.mxu0 %v78
  %177 = vmatprep.subr.mxu0 %v75
  %178 = vmatpush1.msra.mxu0 %v74
  %179 = vmatprep.subr.mxu0 %v71
  %180 = vmatpush1.msra.mxu0 %v70
  %181 = vmatprep.subr.mxu0 %v67
  %182 = vmatpush1.msra.mxu0 %v66
  %183 = vmatprep.subr.mxu0 %v63
  %184 = vmatpush1.msra.mxu0 %v62
  %185 = vmatprep.subr.mxu0 %v59
  %186 = vmatpush1.msra.mxu0 %v58
  %187 = vmatprep.subr.mxu0 %v55
  %188 = vmatpush1.msra.mxu0 %v54
  %189 = vmatprep.subr.mxu0 %v51
  %190 = vmatpush1.msra.mxu0 %v50
  %191 = vmatprep.subr.mxu0 %v47
  %192 = vmatpush1.msra.mxu0 %v46
  %193 = vmatprep.subr.mxu0 %v43
  %194 = vmatpush1.msra.mxu0 %v42
  %195 = vmatprep.subr.mxu0 %v39
  %196 = vmatpush1.msra.mxu0 %v38
  %197 = vmatprep.subr.mxu0 %v35
  %198 = vmatpush1.msra.mxu0 %v34
  %199 = vmatprep.subr.mxu0 %v31
  %200 = vmatpush1.msra.mxu0 %v30
  %201 = vmatprep.subr.mxu0 0.0
  %202 = vmatpush2.msra.mxu0 0.0
  %203 = vmatprep.subr.mxu0 0.0
  %204 = vmatpush2.msra.mxu0 0.0
  %205 = vmatprep.subr.mxu0 0.0
  %206 = vmatpush2.msra.mxu0 0.0
  %207 = vmatprep.subr.mxu0 0.0
  %208 = vmatpush2.msra.mxu0 0.0
  %209 = vmatprep.subr.mxu0 0.0
  %210 = vmatpush2.msra.mxu0 0.0
  %211 = vmatprep.subr.mxu0 0.0
  %212 = vmatpush2.msra.mxu0 0.0
  %213 = vmatprep.subr.mxu0 0.0
  %214 = vmatpush2.msra.mxu0 0.0
  %215 = vmatprep.subr.mxu0 0.0
  %216 = vmatpush2.msra.mxu0 0.0
  %217 = vmatprep.subr.mxu0 0.0
  %218 = vmatpush2.msra.mxu0 0.0
  %219 = vmatprep.subr.mxu0 0.0
  %220 = vmatpush2.msra.mxu0 0.0
  %221 = vmatprep.subr.mxu0 0.0
  %222 = vmatpush2.msra.mxu0 0.0
  %223 = vmatprep.subr.mxu0 0.0
  %224 = vmatpush2.msra.mxu0 0.0
  %225 = vmatprep.subr.mxu0 0.0
  %226 = vmatpush2.msra.mxu0 0.0
  %227 = vmatprep.subr.mxu0 0.0
  %228 = vmatpush2.msra.mxu0 0.0
  %229 = vmatprep.subr.mxu0 0.0
  %230 = vmatpush2.msra.mxu0 0.0
  %231 = vmatprep.subr.mxu0 0.0
  %232 = vmatpush2.msra.mxu0 0.0
  %233 = vmatprep.mubr.f32.mxu0 0.0
  %234 = vmatmul.mubr.f32.gmra.mxu0 %v92
  %v235 = vpop.f32.mrf.mxu0
  %v236 = vadd.f32 0.0, %v235
  %v237 = vpop.f32.mrf.mxu0
  %v238 = vadd.f32 0.0, %v237
  %239 = vdwg.mxu0
  %v240 = vadd.f32 %v94, %v165
  %v241 = vadd.f32 %v95, %v167
  %v242 = vadd.f32 %v96, %v236
  %v243 = vadd.f32 %v97, %v238
  %v244 = vmul.f32 %v240, 0.5
  %v245 = vtanh.pop %v244
  %v246 = vmul.f32 %v245, 0.5
  %v247 = vadd.f32 %v246, 0.5
  %v248 = vmul.f32 %v241, 0.5
  %v249 = vtanh.pop %v248
  %v250 = vmul.f32 %v249, 0.5
  %v251 = vadd.f32 %v250, 0.5
  %v252 = vtanh.pop %v242
  %v253 = vmul.f32 %v243, 0.5
  %v254 = vtanh.pop %v253
  %v255 = vmul.f32 %v254, 0.5
  %v256 = vadd.f32 %v255, 0.5
  %v257 = vmul.f32 %v251, %v93
  %v258 = vmul.f32 %v247, %v252
  %v259 = vadd.f32 %v257, %v258
  %v260 = vtanh.pop %v259
  %v261 = vmul.f32 %v256, %v260
  %262 = vst [vmem:[%s4] sm:$0xff] %v261
  %s263 = scalar_lea.vmem %s0, 32
  %v264 = vld [vmem:[%s263] sm:$0xff]
  %v265 = vld [vmem:[%s263 + $0x8] sm:$0xff]
  %v266 = vld [vmem:[%s263 + $0x10] sm:$0xff]
  %v267 = vld [vmem:[%s263 + $0x18] sm:$0xff]
  %268 = vmatprep.subr.mxu0 %v89
  %269 = vmatpush1.msra.mxu0 %v88
  %270 = vmatprep.subr.mxu0 %v85
  %271 = vmatpush1.msra.mxu0 %v84
  %272 = vmatprep.subr.mxu0 %v81
  %273 = vmatpush1.msra.mxu0 %v80
  %274 = vmatprep.subr.mxu0 %v77
  %275 = vmatpush1.msra.mxu0 %v76
  %276 = vmatprep.subr.mxu0 %v73
  %277 = vmatpush1.msra.mxu0 %v72
  %278 = vmatprep.subr.mxu0 %v69
  %279 = vmatpush1.msra.mxu0 %v68
  %280 = vmatprep.subr.mxu0 %v65
  %281 = vmatpush1.msra.mxu0 %v64
  %282 = vmatprep.subr.mxu0 %v61
  %283 = vmatpush1.msra.mxu0 %v60
  %284 = vmatprep.subr.mxu0 %v57
  %285 = vmatpush1.msra.mxu0 %v56
  %286 = vmatprep.subr.mxu0 %v53
  %287 = vmatpush1.msra.mxu0 %v52
  %288 = vmatprep.subr.mxu0 %v49
  %289 = vmatpush1.msra.mxu0 %v48
  %290 = vmatprep.subr.mxu0 %v45
  %291 = vmatpush1.msra.mxu0 %v44
  %292 = vmatprep.subr.mxu0 %v41
  %293 = vmatpush1.msra.mxu0 %v40
  %294 = vmatprep.subr.mxu0 %v37
  %295 = vmatpush1.msra.mxu0 %v36
  %296 = vmatprep.subr.mxu0 %v33
  %297 = vmatpush1.msra.mxu0 %v32
  %298 = vmatprep.subr.mxu0 %v29
  %299 = vmatpush1.msra.mxu0 %v28
  %300 = vmatprep.subr.mxu0 0.0
  %301 = vmatpush2.msra.mxu0 0.0
  %302 = vmatprep.subr.mxu0 0.0
  %303 = vmatpush2.msra.mxu0 0.0
  %304 = vmatprep.subr.mxu0 0.0
  %305 = vmatpush2.msra.mxu0 0.0
  %306 = vmatprep.subr.mxu0 0.0
  %307 = vmatpush2.msra.mxu0 0.0
  %308 = vmatprep.subr.mxu0 0.0
  %309 = vmatpush2.msra.mxu0 0.0
  %310 = vmatprep.subr.mxu0 0.0
  %311 = vmatpush2.msra.mxu0 0.0
  %312 = vmatprep.subr.mxu0 0.0
  %313 = vmatpush2.msra.mxu0 0.0
  %314 = vmatprep.subr.mxu0 0.0
  %315 = vmatpush2.msra.mxu0 0.0
  %316 = vmatprep.subr.mxu0 0.0
  %317 = vmatpush2.msra.mxu0 0.0
  %318 = vmatprep.subr.mxu0 0.0
  %319 = vmatpush2.msra.mxu0 0.0
  %320 = vmatprep.subr.mxu0 0.0
  %321 = vmatpush2.msra.mxu0 0.0
  %322 = vmatprep.subr.mxu0 0.0
  %323 = vmatpush2.msra.mxu0 0.0
  %324 = vmatprep.subr.mxu0 0.0
  %325 = vmatpush2.msra.mxu0 0.0
  %326 = vmatprep.subr.mxu0 0.0
  %327 = vmatpush2.msra.mxu0 0.0
  %328 = vmatprep.subr.mxu0 0.0
  %329 = vmatpush2.msra.mxu0 0.0
  %330 = vmatprep.subr.mxu0 0.0
  %331 = vmatpush2.msra.mxu0 0.0
  %332 = vmatprep.mubr.f32.mxu0 0.0
  %333 = vmatmul.mubr.f32.gmra.mxu0 %v261
  %v334 = vpop.f32.mrf.mxu0
  %v335 = vadd.f32 0.0, %v334
  %v336 = vpop.f32.mrf.mxu0
  %v337 = vadd.f32 0.0, %v336
  %338 = vdwg.mxu0
  %339 = vmatprep.subr.mxu0 %v91
  %340 = vmatpush1.msra.mxu0 %v90
  %341 = vmatprep.subr.mxu0 %v87
  %342 = vmatpush1.msra.mxu0 %v86
  %343 = vmatprep.subr.mxu0 %v83
  %344 = vmatpush1.msra.mxu0 %v82
  %345 = vmatprep.subr.mxu0 %v79
  %346 = vmatpush1.msra.mxu0 %v78
  %347 = vmatprep.subr.mxu0 %v75
  %348 = vmatpush1.msra.mxu0 %v74
  %349 = vmatprep.subr.mxu0 %v71
  %350 = vmatpush1.msra.mxu0 %v70
  %351 = vmatprep.subr.mxu0 %v67
  %352 = vmatpush1.msra.mxu0 %v66
  %353 = vmatprep.subr.mxu0 %v63
  %354 = vmatpush1.msra.mxu0 %v62
  %355 = vmatprep.subr.mxu0 %v59
  %356 = vmatpush1.msra.mxu0 %v58
  %357 = vmatprep.subr.mxu0 %v55
  %358 = vmatpush1.msra.mxu0 %v54
  %359 = vmatprep.subr.mxu0 %v51
  %360 = vmatpush1.msra.mxu0 %v50
  %361 = vmatprep.subr.mxu0 %v47
  %362 = vmatpush1.msra.mxu0 %v46
  %363 = vmatprep.subr.mxu0 %v43
  %364 = vmatpush1.msra.mxu0 %v42
  %365 = vmatprep.subr.mxu0 %v39
  %366 = vmatpush1.msra.mxu0 %v38
  %367 = vmatprep.subr.mxu0 %v35
  %368 = vmatpush1.msra.mxu0 %v34
  %369 = vmatprep.subr.mxu0 %v31
  %370 = vmatpush1.msra.mxu0 %v30
  %371 = vmatprep.subr.mxu0 0.0
  %372 = vmatpush2.msra.mxu0 0.0
  %373 = vmatprep.subr.mxu0 0.0
  %374 = vmatpush2.msra.mxu0 0.0
  %375 = vmatprep.subr.mxu0 0.0
  %376 = vmatpush2.msra.mxu0 0.0
  %377 = vmatprep.subr.mxu0 0.0
  %378 = vmatpush2.msra.mxu0 0.0
  %379 = vmatprep.subr.mxu0 0.0
  %380 = vmatpush2.msra.mxu0 0.0
  %381 = vmatprep.subr.mxu0 0.0
  %382 = vmatpush2.msra.mxu0 0.0
  %383 = vmatprep.subr.mxu0 0.0
  %384 = vmatpush2.msra.mxu0 0.0
  %385 = vmatprep.subr.mxu0 0.0
  %386 = vmatpush2.msra.mxu0 0.0
  %387 = vmatprep.subr.mxu0 0.0
  %388 = vmatpush2.msra.mxu0 0.0
  %389 = vmatprep.subr.mxu0 0.0
  %390 = vmatpush2.msra.mxu0 0.0
  %391 = vmatprep.subr.mxu0 0.0
  %392 = vmatpush2.msra.mxu0 0.0
  %393 = vmatprep.subr.mxu0 0.0
  %394 = vmatpush2.msra.mxu0 0.0
  %395 = vmatprep.subr.mxu0 0.0
  %396 = vmatpush2.msra.mxu0 0.0
  %397 = vmatprep.subr.mxu0 0.0
  %398 = vmatpush2.msra.mxu0 0.0
  %399 = vmatprep.subr.mxu0 0.0
  %400 = vmatpush2.msra.mxu0 0.0
  %401 = vmatprep.subr.mxu0 0.0
  %402 = vmatpush2.msra.mxu0 0.0
  %403 = vmatprep.mubr.f32.mxu0 0.0
  %404 = vmatmul.mubr.f32.gmra.mxu0 %v261
  %v405 = vpop.f32.mrf.mxu0
  %v406 = vadd.f32 0.0, %v405
  %v407 = vpop.f32.mrf.mxu0
  %v408 = vadd.f32 0.0, %v407
  %409 = vdwg.mxu0
  %v410 = vadd.f32 %v264, %v335
  %v411 = vadd.f32 %v265, %v337
  %v412 = vadd.f32 %v266, %v406
  %v413 = vadd.f32 %v267, %v408
  %v414 = vmul.f32 %v410, 0.5
  %v415 = vtanh.pop %v414
  %v416 = vmul.f32 %v415, 0.5
  %v417 = vadd.f32 %v416, 0.5
  %v418 = vmul.f32 %v411, 0.5
  %v419 = vtanh.pop %v418
  %v420 = vmul.f32 %v419, 0.5
  %v421 = vadd.f32 %v420, 0.5
  %v422 = vtanh.pop %v412
  %v423 = vmul.f32 %v413, 0.5
  %v424 = vtanh.pop %v423
  %v425 = vmul.f32 %v424, 0.5
  %v426 = vadd.f32 %v425, 0.5
  %v427 = vmul.f32 %v421, %v259
  %v428 = vmul.f32 %v417, %v422
  %v429 = vadd.f32 %v427, %v428
  %v430 = vtanh.pop %v429
  %v431 = vmul.f32 %v426, %v430
  %s432 = scalar_lea.vmem %s4, 8
  %433 = vst [vmem:[%s432] sm:$0xff] %v431
  %s434 = scalar_lea.vmem %s0, 64
  %v435 = vld [vmem:[%s434] sm:$0xff]
  %v436 = vld [vmem:[%s434 + $0x8] sm:$0xff]
  %v437 = vld [vmem:[%s434 + $0x10] sm:$0xff]
  %v438 = vld [vmem:[%s434 + $0x18] sm:$0xff]
  %439 = vmatprep.subr.mxu0 %v89
  %440 = vmatpush1.msra.mxu0 %v88
  %441 = vmatprep.subr.mxu0 %v85
  %442 = vmatpush1.msra.mxu0 %v84
  %443 = vmatprep.subr.mxu0 %v81
  %444 = vmatpush1.msra.mxu0 %v80
  %445 = vmatprep.subr.mxu0 %v77
  %446 = vmatpush1.msra.mxu0 %v76
  %447 = vmatprep.subr.mxu0 %v73
  %448 = vmatpush1.msra.mxu0 %v72
  %449 = vmatprep.subr.mxu0 %v69
  %450 = vmatpush1.msra.mxu0 %v68
  %451 = vmatprep.subr.mxu0 %v65
  %452 = vmatpush1.msra.mxu0 %v64
  %453 = vmatprep.subr.mxu0 %v61
  %454 = vmatpush1.msra.mxu0 %v60
  %455 = vmatprep.subr.mxu0 %v57
  %456 = vmatpush1.msra.mxu0 %v56
  %457 = vmatprep.subr.mxu0 %v53
  %458 = vmatpush1.msra.mxu0 %v52
  %459 = vmatprep.subr.mxu0 %v49
  %460 = vmatpush1.msra.mxu0 %v48
  %461 = vmatprep.subr.mxu0 %v45
  %462 = vmatpush1.msra.mxu0 %v44
  %463 = vmatprep.subr.mxu0 %v41
  %464 = vmatpush1.msra.mxu0 %v40
  %465 = vmatprep.subr.mxu0 %v37
  %466 = vmatpush1.msra.mxu0 %v36
  %467 = vmatprep.subr.mxu0 %v33
  %468 = vmatpush1.msra.mxu0 %v32
  %469 = vmatprep.subr.mxu0 %v29
  %470 = vmatpush1.msra.mxu0 %v28
  %471 = vmatprep.subr.mxu0 0.0
  %472 = vmatpush2.msra.mxu0 0.0
  %473 = vmatprep.subr.mxu0 0.0
  %474 = vmatpush2.msra.mxu0 0.0
  %475 = vmatprep.subr.mxu0 0.0
  %476 = vmatpush2.msra.mxu0 0.0
  %477 = vmatprep.subr.mxu0 0.0
  %478 = vmatpush2.msra.mxu0 0.0
  %479 = vmatprep.subr.mxu0 0.0
  %480 = vmatpush2.msra.mxu0 0.0
  %481 = vmatprep.subr.mxu0 0.0
  %482 = vmatpush2.msra.mxu0 0.0
  %483 = vmatprep.subr.mxu0 0.0
  %484 = vmatpush2.msra.mxu0 0.0
  %485 = vmatprep.subr.mxu0 0.0
  %486 = vmatpush2.msra.mxu0 0.0
  %487 = vmatprep.subr.mxu0 0.0
  %488 = vmatpush2.msra.mxu0 0.0
  %489 = vmatprep.subr.mxu0 0.0
  %490 = vmatpush2.msra.mxu0 0.0
  %491 = vmatprep.subr.mxu0 0.0
  %492 = vmatpush2.msra.mxu0 0.0
  %493 = vmatprep.subr.mxu0 0.0
  %494 = vmatpush2.msra.mxu0 0.0
  %495 = vmatprep.subr.mxu0 0.0
  %496 = vmatpush2.msra.mxu0 0.0
  %497 = vmatprep.subr.mxu0 0.0
  %498 = vmatpush2.msra.mxu0 0.0
  %499 = vmatprep.subr.mxu0 0.0
  %500 = vmatpush2.msra.mxu0 0.0
  %501 = vmatprep.subr.mxu0 0.0
  %502 = vmatpush2.msra.mxu0 0.0
  %503 = vmatprep.mubr.f32.mxu0 0.0
  %504 = vmatmul.mubr.f32.gmra.mxu0 %v431
  %v505 = vpop.f32.mrf.mxu0
  %v506 = vadd.f32 0.0, %v505
  %v507 = vpop.f32.mrf.mxu0
  %v508 = vadd.f32 0.0, %v507
  %509 = vdwg.mxu0
  %510 = vmatprep.subr.mxu0 %v91
  %511 = vmatpush1.msra.mxu0 %v90
  %512 = vmatprep.subr.mxu0 %v87
  %513 = vmatpush1.msra.mxu0 %v86
  %514 = vmatprep.subr.mxu0 %v83
  %515 = vmatpush1.msra.mxu0 %v82
  %516 = vmatprep.subr.mxu0 %v79
  %517 = vmatpush1.msra.mxu0 %v78
  %518 = vmatprep.subr.mxu0 %v75
  %519 = vmatpush1.msra.mxu0 %v74
  %520 = vmatprep.subr.mxu0 %v71
  %521 = vmatpush1.msra.mxu0 %v70
  %522 = vmatprep.subr.mxu0 %v67
  %523 = vmatpush1.msra.mxu0 %v66
  %524 = vmatprep.subr.mxu0 %v63
  %525 = vmatpush1.msra.mxu0 %v62
  %526 = vmatprep.subr.mxu0 %v59
  %527 = vmatpush1.msra.mxu0 %v58
  %528 = vmatprep.subr.mxu0 %v55
  %529 = vmatpush1.msra.mxu0 %v54
  %530 = vmatprep.subr.mxu0 %v51
  %531 = vmatpush1.msra.mxu0 %v50
  %532 = vmatprep.subr.mxu0 %v47
  %533 = vmatpush1.msra.mxu0 %v46
  %534 = vmatprep.subr.mxu0 %v43
  %535 = vmatpush1.msra.mxu0 %v42
  %536 = vmatprep.subr.mxu0 %v39
  %537 = vmatpush1.msra.mxu0 %v38
  %538 = vmatprep.subr.mxu0 %v35
  %539 = vmatpush1.msra.mxu0 %v34
  %540 = vmatprep.subr.mxu0 %v31
  %541 = vmatpush1.msra.mxu0 %v30
  %542 = vmatprep.subr.mxu0 0.0
  %543 = vmatpush2.msra.mxu0 0.0
  %544 = vmatprep.subr.mxu0 0.0
  %545 = vmatpush2.msra.mxu0 0.0
  %546 = vmatprep.subr.mxu0 0.0
  %547 = vmatpush2.msra.mxu0 0.0
  %548 = vmatprep.subr.mxu0 0.0
  %549 = vmatpush2.msra.mxu0 0.0
  %550 = vmatprep.subr.mxu0 0.0
  %551 = vmatpush2.msra.mxu0 0.0
  %552 = vmatprep.subr.mxu0 0.0
  %553 = vmatpush2.msra.mxu0 0.0
  %554 = vmatprep.subr.mxu0 0.0
  %555 = vmatpush2.msra.mxu0 0.0
  %556 = vmatprep.subr.mxu0 0.0
  %557 = vmatpush2.msra.mxu0 0.0
  %558 = vmatprep.subr.mxu0 0.0
  %559 = vmatpush2.msra.mxu0 0.0
  %560 = vmatprep.subr.mxu0 0.0
  %561 = vmatpush2.msra.mxu0 0.0
  %562 = vmatprep.subr.mxu0 0.0
  %563 = vmatpush2.msra.mxu0 0.0
  %564 = vmatprep.subr.mxu0 0.0
  %565 = vmatpush2.msra.mxu0 0.0
  %566 = vmatprep.subr.mxu0 0.0
  %567 = vmatpush2.msra.mxu0 0.0
  %568 = vmatprep.subr.mxu0 0.0
  %569 = vmatpush2.msra.mxu0 0.0
  %570 = vmatprep.subr.mxu0 0.0
  %571 = vmatpush2.msra.mxu0 0.0
  %572 = vmatprep.subr.mxu0 0.0
  %573 = vmatpush2.msra.mxu0 0.0
  %574 = vmatprep.mubr.f32.mxu0 0.0
  %575 = vmatmul.mubr.f32.gmra.mxu0 %v431
  %v576 = vpop.f32.mrf.mxu0
  %v577 = vadd.f32 0.0, %v576
  %v578 = vpop.f32.mrf.mxu0
  %v579 = vadd.f32 0.0, %v578
  %580 = vdwg.mxu0
  %v581 = vadd.f32 %v435, %v506
  %v582 = vadd.f32 %v436, %v508
  %v583 = vadd.f32 %v437, %v577
  %v584 = vadd.f32 %v438, %v579
  %v585 = vmul.f32 %v581, 0.5
  %v586 = vtanh.pop %v585
  %v587 = vmul.f32 %v586, 0.5
  %v588 = vadd.f32 %v587, 0.5
  %v589 = vmul.f32 %v582, 0.5
  %v590 = vtanh.pop %v589
  %v591 = vmul.f32 %v590, 0.5
  %v592 = vadd.f32 %v591, 0.5
  %v593 = vtanh.pop %v583
  %v594 = vmul.f32 %v584, 0.5
  %v595 = vtanh.pop %v594
  %v596 = vmul.f32 %v595, 0.5
  %v597 = vadd.f32 %v596, 0.5
  %v598 = vmul.f32 %v592, %v429
  %v599 = vmul.f32 %v588, %v593
  %v600 = vadd.f32 %v598, %v599
  %v601 = vtanh.pop %v600
  %v602 = vmul.f32 %v597, %v601
  %s603 = scalar_lea.vmem %s4, 16
  %604 = vst [vmem:[%s603] sm:$0xff] %v602
  %s605 = scalar_lea.vmem %s0, 96
  %v606 = vld [vmem:[%s605] sm:$0xff]
  %v607 = vld [vmem:[%s605 + $0x8] sm:$0xff]
  %v608 = vld [vmem:[%s605 + $0x10] sm:$0xff]
  %v609 = vld [vmem:[%s605 + $0x18] sm:$0xff]
  %610 = vmatprep.subr.mxu0 %v89
  %611 = vmatpush1.msra.mxu0 %v88
  %612 = vmatprep.subr.mxu0 %v85
  %613 = vmatpush1.msra.mxu0 %v84
  %614 = vmatprep.subr.mxu0 %v81
  %615 = vmatpush1.msra.mxu0 %v80
  %616 = vmatprep.subr.mxu0 %v77
  %617 = vmatpush1.msra.mxu0 %v76
  %618 = vmatprep.subr.mxu0 %v73
  %619 = vmatpush1.msra.mxu0 %v72
  %620 = vmatprep.subr.mxu0 %v69
  %621 = vmatpush1.msra.mxu0 %v68
  %622 = vmatprep.subr.mxu0 %v65
  %623 = vmatpush1.msra.mxu0 %v64
  %624 = vmatprep.subr.mxu0 %v61
  %625 = vmatpush1.msra.mxu0 %v60
  %626 = vmatprep.subr.mxu0 %v57
  %627 = vmatpush1.msra.mxu0 %v56
  %628 = vmatprep.subr.mxu0 %v53
  %629 = vmatpush1.msra.mxu0 %v52
  %630 = vmatprep.subr.mxu0 %v49
  %631 = vmatpush1.msra.mxu0 %v48
  %632 = vmatprep.subr.mxu0 %v45
  %633 = vmatpush1.msra.mxu0 %v44
  %634 = vmatprep.subr.mxu0 %v41
  %635 = vmatpush1.msra.mxu0 %v40
  %636 = vmatprep.subr.mxu0 %v37
  %637 = vmatpush1.msra.mxu0 %v36
  %638 = vmatprep.subr.mxu0 %v33
  %639 = vmatpush1.msra.mxu0 %v32
  %640 = vmatprep.subr.mxu0 %v29
  %641 = vmatpush1.msra.mxu0 %v28
  %642 = vmatprep.subr.mxu0 0.0
  %643 = vmatpush2.msra.mxu0 0.0
  %644 = vmatprep.subr.mxu0 0.0
  %645 = vmatpush2.msra.mxu0 0.0
  %646 = vmatprep.subr.mxu0 0.0
  %647 = vmatpush2.msra.mxu0 0.0
  %648 = vmatprep.subr.mxu0 0.0
  %649 = vmatpush2.msra.mxu0 0.0
  %650 = vmatprep.subr.mxu0 0.0
  %651 = vmatpush2.msra.mxu0 0.0
  %652 = vmatprep.subr.mxu0 0.0
  %653 = vmatpush2.msra.mxu0 0.0
  %654 = vmatprep.subr.mxu0 0.0
  %655 = vmatpush2.msra.mxu0 0.0
  %656 = vmatprep.subr.mxu0 0.0
  %657 = vmatpush2.msra.mxu0 0.0
  %658 = vmatprep.subr.mxu0 0.0
  %659 = vmatpush2.msra.mxu0 0.0
  %660 = vmatprep.subr.mxu0 0.0
  %661 = vmatpush2.msra.mxu0 0.0
  %662 = vmatprep.subr.mxu0 0.0
  %663 = vmatpush2.msra.mxu0 0.0
  %664 = vmatprep.subr.mxu0 0.0
  %665 = vmatpush2.msra.mxu0 0.0
  %666 = vmatprep.subr.mxu0 0.0
  %667 = vmatpush2.msra.mxu0 0.0
  %668 = vmatprep.subr.mxu0 0.0
  %669 = vmatpush2.msra.mxu0 0.0
  %670 = vmatprep.subr.mxu0 0.0
  %671 = vmatpush2.msra.mxu0 0.0
  %672 = vmatprep.subr.mxu0 0.0
  %673 = vmatpush2.msra.mxu0 0.0
  %674 = vmatprep.mubr.f32.mxu0 0.0
  %675 = vmatmul.mubr.f32.gmra.mxu0 %v602
  %v676 = vpop.f32.mrf.mxu0
  %v677 = vadd.f32 0.0, %v676
  %v678 = vpop.f32.mrf.mxu0
  %v679 = vadd.f32 0.0, %v678
  %680 = vdwg.mxu0
  %681 = vmatprep.subr.mxu0 %v91
  %682 = vmatpush1.msra.mxu0 %v90
  %683 = vmatprep.subr.mxu0 %v87
  %684 = vmatpush1.msra.mxu0 %v86
  %685 = vmatprep.subr.mxu0 %v83
  %686 = vmatpush1.msra.mxu0 %v82
  %687 = vmatprep.subr.mxu0 %v79
  %688 = vmatpush1.msra.mxu0 %v78
  %689 = vmatprep.subr.mxu0 %v75
  %690 = vmatpush1.msra.mxu0 %v74
  %691 = vmatprep.subr.mxu0 %v71
  %692 = vmatpush1.msra.mxu0 %v70
  %693 = vmatprep.subr.mxu0 %v67
  %694 = vmatpush1.msra.mxu0 %v66
  %695 = vmatprep.subr.mxu0 %v63
  %696 = vmatpush1.msra.mxu0 %v62
  %697 = vmatprep.subr.mxu0 %v59
  %698 = vmatpush1.msra.mxu0 %v58
  %699 = vmatprep.subr.mxu0 %v55
  %700 = vmatpush1.msra.mxu0 %v54
  %701 = vmatprep.subr.mxu0 %v51
  %702 = vmatpush1.msra.mxu0 %v50
  %703 = vmatprep.subr.mxu0 %v47
  %704 = vmatpush1.msra.mxu0 %v46
  %705 = vmatprep.subr.mxu0 %v43
  %706 = vmatpush1.msra.mxu0 %v42
  %707 = vmatprep.subr.mxu0 %v39
  %708 = vmatpush1.msra.mxu0 %v38
  %709 = vmatprep.subr.mxu0 %v35
  %710 = vmatpush1.msra.mxu0 %v34
  %711 = vmatprep.subr.mxu0 %v31
  %712 = vmatpush1.msra.mxu0 %v30
  %713 = vmatprep.subr.mxu0 0.0
  %714 = vmatpush2.msra.mxu0 0.0
  %715 = vmatprep.subr.mxu0 0.0
  %716 = vmatpush2.msra.mxu0 0.0
  %717 = vmatprep.subr.mxu0 0.0
  %718 = vmatpush2.msra.mxu0 0.0
  %719 = vmatprep.subr.mxu0 0.0
  %720 = vmatpush2.msra.mxu0 0.0
  %721 = vmatprep.subr.mxu0 0.0
  %722 = vmatpush2.msra.mxu0 0.0
  %723 = vmatprep.subr.mxu0 0.0
  %724 = vmatpush2.msra.mxu0 0.0
  %725 = vmatprep.subr.mxu0 0.0
  %726 = vmatpush2.msra.mxu0 0.0
  %727 = vmatprep.subr.mxu0 0.0
  %728 = vmatpush2.msra.mxu0 0.0
  %729 = vmatprep.subr.mxu0 0.0
  %730 = vmatpush2.msra.mxu0 0.0
  %731 = vmatprep.subr.mxu0 0.0
  %732 = vmatpush2.msra.mxu0 0.0
  %733 = vmatprep.subr.mxu0 0.0
  %734 = vmatpush2.msra.mxu0 0.0
  %735 = vmatprep.subr.mxu0 0.0
  %736 = vmatpush2.msra.mxu0 0.0
  %737 = vmatprep.subr.mxu0 0.0
  %738 = vmatpush2.msra.mxu0 0.0
  %739 = vmatprep.subr.mxu0 0.0
  %740 = vmatpush2.msra.mxu0 0.0
  %741 = vmatprep.subr.mxu0 0.0
  %742 = vmatpush2.msra.mxu0 0.0
  %743 = vmatprep.subr.mxu0 0.0
  %744 = vmatpush2.msra.mxu0 0.0
  %745 = vmatprep.mubr.f32.mxu0 0.0
  %746 = vmatmul.mubr.f32.gmra.mxu0 %v602
  %v747 = vpop.f32.mrf.mxu0
  %v748 = vadd.f32 0.0, %v747
  %v749 = vpop.f32.mrf.mxu0
  %v750 = vadd.f32 0.0, %v749
  %751 = vdwg.mxu0
  %v752 = vadd.f32 %v606, %v677
  %v753 = vadd.f32 %v607, %v679
  %v754 = vadd.f32 %v608, %v748
  %v755 = vadd.f32 %v609, %v750
  %v756 = vmul.f32 %v752, 0.5
  %v757 = vtanh.pop %v756
  %v758 = vmul.f32 %v757, 0.5
  %v759 = vadd.f32 %v758, 0.5
  %v760 = vmul.f32 %v753, 0.5
  %v761 = vtanh.pop %v760
  %v762 = vmul.f32 %v761, 0.5
  %v763 = vadd.f32 %v762, 0.5
  %v764 = vtanh.pop %v754
  %v765 = vmul.f32 %v755, 0.5
  %v766 = vtanh.pop %v765
  %v767 = vmul.f32 %v766, 0.5
  %v768 = vadd.f32 %v767, 0.5
  %v769 = vmul.f32 %v763, %v600
  %v770 = vmul.f32 %v759, %v764
  %v771 = vadd.f32 %v769, %v770
  %v772 = vtanh.pop %v771
  %v773 = vmul.f32 %v768, %v772
  %s774 = scalar_lea.vmem %s4, 24
  %775 = vst [vmem:[%s774] sm:$0xff] %v773
  %s776 = scalar_lea.vmem %s0, 128
  %v777 = vld [vmem:[%s776] sm:$0xff]
  %v778 = vld [vmem:[%s776 + $0x8] sm:$0xff]
  %v779 = vld [vmem:[%s776 + $0x10] sm:$0xff]
  %v780 = vld [vmem:[%s776 + $0x18] sm:$0xff]
  %781 = vmatprep.subr.mxu0 %v89
  %782 = vmatpush1.msra.mxu0 %v88
  %783 = vmatprep.subr.mxu0 %v85
  %784 = vmatpush1.msra.mxu0 %v84
  %785 = vmatprep.subr.mxu0 %v81
  %786 = vmatpush1.msra.mxu0 %v80
  %787 = vmatprep.subr.mxu0 %v77
  %788 = vmatpush1.msra.mxu0 %v76
  %789 = vmatprep.subr.mxu0 %v73
  %790 = vmatpush1.msra.mxu0 %v72
  %791 = vmatprep.subr.mxu0 %v69
  %792 = vmatpush1.msra.mxu0 %v68
  %793 = vmatprep.subr.mxu0 %v65
  %794 = vmatpush1.msra.mxu0 %v64
  %795 = vmatprep.subr.mxu0 %v61
  %796 = vmatpush1.msra.mxu0 %v60
  %797 = vmatprep.subr.mxu0 %v57
  %798 = vmatpush1.msra.mxu0 %v56
  %799 = vmatprep.subr.mxu0 %v53
  %800 = vmatpush1.msra.mxu0 %v52
  %801 = vmatprep.subr.mxu0 %v49
  %802 = vmatpush1.msra.mxu0 %v48
  %803 = vmatprep.subr.mxu0 %v45
  %804 = vmatpush1.msra.mxu0 %v44
  %805 = vmatprep.subr.mxu0 %v41
  %806 = vmatpush1.msra.mxu0 %v40
  %807 = vmatprep.subr.mxu0 %v37
  %808 = vmatpush1.msra.mxu0 %v36
  %809 = vmatprep.subr.mxu0 %v33
  %810 = vmatpush1.msra.mxu0 %v32
  %811 = vmatprep.subr.mxu0 %v29
  %812 = vmatpush1.msra.mxu0 %v28
  %813 = vmatprep.subr.mxu0 0.0
  %814 = vmatpush2.msra.mxu0 0.0
  %815 = vmatprep.subr.mxu0 0.0
  %816 = vmatpush2.msra.mxu0 0.0
  %817 = vmatprep.subr.mxu0 0.0
  %818 = vmatpush2.msra.mxu0 0.0
  %819 = vmatprep.subr.mxu0 0.0
  %820 = vmatpush2.msra.mxu0 0.0
  %821 = vmatprep.subr.mxu0 0.0
  %822 = vmatpush2.msra.mxu0 0.0
  %823 = vmatprep.subr.mxu0 0.0
  %824 = vmatpush2.msra.mxu0 0.0
  %825 = vmatprep.subr.mxu0 0.0
  %826 = vmatpush2.msra.mxu0 0.0
  %827 = vmatprep.subr.mxu0 0.0
  %828 = vmatpush2.msra.mxu0 0.0
  %829 = vmatprep.subr.mxu0 0.0
  %830 = vmatpush2.msra.mxu0 0.0
  %831 = vmatprep.subr.mxu0 0.0
  %832 = vmatpush2.msra.mxu0 0.0
  %833 = vmatprep.subr.mxu0 0.0
  %834 = vmatpush2.msra.mxu0 0.0
  %835 = vmatprep.subr.mxu0 0.0
  %836 = vmatpush2.msra.mxu0 0.0
  %837 = vmatprep.subr.mxu0 0.0
  %838 = vmatpush2.msra.mxu0 0.0
  %839 = vmatprep.subr.mxu0 0.0
  %840 = vmatpush2.msra.mxu0 0.0
  %841 = vmatprep.subr.mxu0 0.0
  %842 = vmatpush2.msra.mxu0 0.0
  %843 = vmatprep.subr.mxu0 0.0
  %844 = vmatpush2.msra.mxu0 0.0
  %845 = vmatprep.mubr.f32.mxu0 0.0
  %846 = vmatmul.mubr.f32.gmra.mxu0 %v773
  %v847 = vpop.f32.mrf.mxu0
  %v848 = vadd.f32 0.0, %v847
  %v849 = vpop.f32.mrf.mxu0
  %v850 = vadd.f32 0.0, %v849
  %851 = vdwg.mxu0
  %852 = vmatprep.subr.mxu0 %v91
  %853 = vmatpush1.msra.mxu0 %v90
  %854 = vmatprep.subr.mxu0 %v87
  %855 = vmatpush1.msra.mxu0 %v86
  %856 = vmatprep.subr.mxu0 %v83
  %857 = vmatpush1.msra.mxu0 %v82
  %858 = vmatprep.subr.mxu0 %v79
  %859 = vmatpush1.msra.mxu0 %v78
  %860 = vmatprep.subr.mxu0 %v75
  %861 = vmatpush1.msra.mxu0 %v74
  %862 = vmatprep.subr.mxu0 %v71
  %863 = vmatpush1.msra.mxu0 %v70
  %864 = vmatprep.subr.mxu0 %v67
  %865 = vmatpush1.msra.mxu0 %v66
  %866 = vmatprep.subr.mxu0 %v63
  %867 = vmatpush1.msra.mxu0 %v62
  %868 = vmatprep.subr.mxu0 %v59
  %869 = vmatpush1.msra.mxu0 %v58
  %870 = vmatprep.subr.mxu0 %v55
  %871 = vmatpush1.msra.mxu0 %v54
  %872 = vmatprep.subr.mxu0 %v51
  %873 = vmatpush1.msra.mxu0 %v50
  %874 = vmatprep.subr.mxu0 %v47
  %875 = vmatpush1.msra.mxu0 %v46
  %876 = vmatprep.subr.mxu0 %v43
  %877 = vmatpush1.msra.mxu0 %v42
  %878 = vmatprep.subr.mxu0 %v39
  %879 = vmatpush1.msra.mxu0 %v38
  %880 = vmatprep.subr.mxu0 %v35
  %881 = vmatpush1.msra.mxu0 %v34
  %882 = vmatprep.subr.mxu0 %v31
  %883 = vmatpush1.msra.mxu0 %v30
  %884 = vmatprep.subr.mxu0 0.0
  %885 = vmatpush2.msra.mxu0 0.0
  %886 = vmatprep.subr.mxu0 0.0
  %887 = vmatpush2.msra.mxu0 0.0
  %888 = vmatprep.subr.mxu0 0.0
  %889 = vmatpush2.msra.mxu0 0.0
  %890 = vmatprep.subr.mxu0 0.0
  %891 = vmatpush2.msra.mxu0 0.0
  %892 = vmatprep.subr.mxu0 0.0
  %893 = vmatpush2.msra.mxu0 0.0
  %894 = vmatprep.subr.mxu0 0.0
  %895 = vmatpush2.msra.mxu0 0.0
  %896 = vmatprep.subr.mxu0 0.0
  %897 = vmatpush2.msra.mxu0 0.0
  %898 = vmatprep.subr.mxu0 0.0
  %899 = vmatpush2.msra.mxu0 0.0
  %900 = vmatprep.subr.mxu0 0.0
  %901 = vmatpush2.msra.mxu0 0.0
  %902 = vmatprep.subr.mxu0 0.0
  %903 = vmatpush2.msra.mxu0 0.0
  %904 = vmatprep.subr.mxu0 0.0
  %905 = vmatpush2.msra.mxu0 0.0
  %906 = vmatprep.subr.mxu0 0.0
  %907 = vmatpush2.msra.mxu0 0.0
  %908 = vmatprep.subr.mxu0 0.0
  %909 = vmatpush2.msra.mxu0 0.0
  %910 = vmatprep.subr.mxu0 0.0
  %911 = vmatpush2.msra.mxu0 0.0
  %912 = vmatprep.subr.mxu0 0.0
  %913 = vmatpush2.msra.mxu0 0.0
  %914 = vmatprep.subr.mxu0 0.0
  %915 = vmatpush2.msra.mxu0 0.0
  %916 = vmatprep.mubr.f32.mxu0 0.0
  %917 = vmatmul.mubr.f32.gmra.mxu0 %v773
  %v918 = vpop.f32.mrf.mxu0
  %v919 = vadd.f32 0.0, %v918
  %v920 = vpop.f32.mrf.mxu0
  %v921 = vadd.f32 0.0, %v920
  %922 = vdwg.mxu0
  %v923 = vadd.f32 %v777, %v848
  %v924 = vadd.f32 %v778, %v850
  %v925 = vadd.f32 %v779, %v919
  %v926 = vadd.f32 %v780, %v921
  %v927 = vmul.f32 %v923, 0.5
  %v928 = vtanh.pop %v927
  %v929 = vmul.f32 %v928, 0.5
  %v930 = vadd.f32 %v929, 0.5
  %v931 = vmul.f32 %v924, 0.5
  %v932 = vtanh.pop %v931
  %v933 = vmul.f32 %v932, 0.5
  %v934 = vadd.f32 %v933, 0.5
  %v935 = vtanh.pop %v925
  %v936 = vmul.f32 %v926, 0.5
  %v937 = vtanh.pop %v936
  %v938 = vmul.f32 %v937, 0.5
  %v939 = vadd.f32 %v938, 0.5
  %v940 = vmul.f32 %v934, %v771
  %v941 = vmul.f32 %v930, %v935
  %v942 = vadd.f32 %v940, %v941
  %v943 = vtanh.pop %v942
  %v944 = vmul.f32 %v939, %v943
  %s945 = scalar_lea.vmem %s4, 32
  %946 = vst [vmem:[%s945] sm:$0xff] %v944
  %s947 = scalar_lea.vmem %s0, 160
  %v948 = vld [vmem:[%s947] sm:$0xff]
  %v949 = vld [vmem:[%s947 + $0x8] sm:$0xff]
  %v950 = vld [vmem:[%s947 + $0x10] sm:$0xff]
  %v951 = vld [vmem:[%s947 + $0x18] sm:$0xff]
  %952 = vmatprep.subr.mxu0 %v89
  %953 = vmatpush1.msra.mxu0 %v88
  %954 = vmatprep.subr.mxu0 %v85
  %955 = vmatpush1.msra.mxu0 %v84
  %956 = vmatprep.subr.mxu0 %v81
  %957 = vmatpush1.msra.mxu0 %v80
  %958 = vmatprep.subr.mxu0 %v77
  %959 = vmatpush1.msra.mxu0 %v76
  %960 = vmatprep.subr.mxu0 %v73
  %961 = vmatpush1.msra.mxu0 %v72
  %962 = vmatprep.subr.mxu0 %v69
  %963 = vmatpush1.msra.mxu0 %v68
  %964 = vmatprep.subr.mxu0 %v65
  %965 = vmatpush1.msra.mxu0 %v64
  %966 = vmatprep.subr.mxu0 %v61
  %967 = vmatpush1.msra.mxu0 %v60
  %968 = vmatprep.subr.mxu0 %v57
  %969 = vmatpush1.msra.mxu0 %v56
  %970 = vmatprep.subr.mxu0 %v53
  %971 = vmatpush1.msra.mxu0 %v52
  %972 = vmatprep.subr.mxu0 %v49
  %973 = vmatpush1.msra.mxu0 %v48
  %974 = vmatprep.subr.mxu0 %v45
  %975 = vmatpush1.msra.mxu0 %v44
  %976 = vmatprep.subr.mxu0 %v41
  %977 = vmatpush1.msra.mxu0 %v40
  %978 = vmatprep.subr.mxu0 %v37
  %979 = vmatpush1.msra.mxu0 %v36
  %980 = vmatprep.subr.mxu0 %v33
  %981 = vmatpush1.msra.mxu0 %v32
  %982 = vmatprep.subr.mxu0 %v29
  %983 = vmatpush1.msra.mxu0 %v28
  %984 = vmatprep.subr.mxu0 0.0
  %985 = vmatpush2.msra.mxu0 0.0
  %986 = vmatprep.subr.mxu0 0.0
  %987 = vmatpush2.msra.mxu0 0.0
  %988 = vmatprep.subr.mxu0 0.0
  %989 = vmatpush2.msra.mxu0 0.0
  %990 = vmatprep.subr.mxu0 0.0
  %991 = vmatpush2.msra.mxu0 0.0
  %992 = vmatprep.subr.mxu0 0.0
  %993 = vmatpush2.msra.mxu0 0.0
  %994 = vmatprep.subr.mxu0 0.0
  %995 = vmatpush2.msra.mxu0 0.0
  %996 = vmatprep.subr.mxu0 0.0
  %997 = vmatpush2.msra.mxu0 0.0
  %998 = vmatprep.subr.mxu0 0.0
  %999 = vmatpush2.msra.mxu0 0.0
  %1000 = vmatprep.subr.mxu0 0.0
  %1001 = vmatpush2.msra.mxu0 0.0
  %1002 = vmatprep.subr.mxu0 0.0
  %1003 = vmatpush2.msra.mxu0 0.0
  %1004 = vmatprep.subr.mxu0 0.0
  %1005 = vmatpush2.msra.mxu0 0.0
  %1006 = vmatprep.subr.mxu0 0.0
  %1007 = vmatpush2.msra.mxu0 0.0
  %1008 = vmatprep.subr.mxu0 0.0
  %1009 = vmatpush2.msra.mxu0 0.0
  %1010 = vmatprep.subr.mxu0 0.0
  %1011 = vmatpush2.msra.mxu0 0.0
  %1012 = vmatprep.subr.mxu0 0.0
  %1013 = vmatpush2.msra.mxu0 0.0
  %1014 = vmatprep.subr.mxu0 0.0
  %1015 = vmatpush2.msra.mxu0 0.0
  %1016 = vmatprep.mubr.f32.mxu0 0.0
  %1017 = vmatmul.mubr.f32.gmra.mxu0 %v944
  %v1018 = vpop.f32.mrf.mxu0
  %v1019 = vadd.f32 0.0, %v1018
  %v1020 = vpop.f32.mrf.mxu0
  %v1021 = vadd.f32 0.0, %v1020
  %1022 = vdwg.mxu0
  %1023 = vmatprep.subr.mxu0 %v91
  %1024 = vmatpush1.msra.mxu0 %v90
  %1025 = vmatprep.subr.mxu0 %v87
  %1026 = vmatpush1.msra.mxu0 %v86
  %1027 = vmatprep.subr.mxu0 %v83
  %1028 = vmatpush1.msra.mxu0 %v82
  %1029 = vmatprep.subr.mxu0 %v79
  %1030 = vmatpush1.msra.mxu0 %v78
  %1031 = vmatprep.subr.mxu0 %v75
  %1032 = vmatpush1.msra.mxu0 %v74
  %1033 = vmatprep.subr.mxu0 %v71
  %1034 = vmatpush1.msra.mxu0 %v70
  %1035 = vmatprep.subr.mxu0 %v67
  %1036 = vmatpush1.msra.mxu0 %v66
  %1037 = vmatprep.subr.mxu0 %v63
  %1038 = vmatpush1.msra.mxu0 %v62
  %1039 = vmatprep.subr.mxu0 %v59
  %1040 = vmatpush1.msra.mxu0 %v58
  %1041 = vmatprep.subr.mxu0 %v55
  %1042 = vmatpush1.msra.mxu0 %v54
  %1043 = vmatprep.subr.mxu0 %v51
  %1044 = vmatpush1.msra.mxu0 %v50
  %1045 = vmatprep.subr.mxu0 %v47
  %1046 = vmatpush1.msra.mxu0 %v46
  %1047 = vmatprep.subr.mxu0 %v43
  %1048 = vmatpush1.msra.mxu0 %v42
  %1049 = vmatprep.subr.mxu0 %v39
  %1050 = vmatpush1.msra.mxu0 %v38
  %1051 = vmatprep.subr.mxu0 %v35
  %1052 = vmatpush1.msra.mxu0 %v34
  %1053 = vmatprep.subr.mxu0 %v31
  %1054 = vmatpush1.msra.mxu0 %v30
  %1055 = vmatprep.subr.mxu0 0.0
  %1056 = vmatpush2.msra.mxu0 0.0
  %1057 = vmatprep.subr.mxu0 0.0
  %1058 = vmatpush2.msra.mxu0 0.0
  %1059 = vmatprep.subr.mxu0 0.0
  %1060 = vmatpush2.msra.mxu0 0.0
  %1061 = vmatprep.subr.mxu0 0.0
  %1062 = vmatpush2.msra.mxu0 0.0
  %1063 = vmatprep.subr.mxu0 0.0
  %1064 = vmatpush2.msra.mxu0 0.0
  %1065 = vmatprep.subr.mxu0 0.0
  %1066 = vmatpush2.msra.mxu0 0.0
  %1067 = vmatprep.subr.mxu0 0.0
  %1068 = vmatpush2.msra.mxu0 0.0
  %1069 = vmatprep.subr.mxu0 0.0
  %1070 = vmatpush2.msra.mxu0 0.0
  %1071 = vmatprep.subr.mxu0 0.0
  %1072 = vmatpush2.msra.mxu0 0.0
  %1073 = vmatprep.subr.mxu0 0.0
  %1074 = vmatpush2.msra.mxu0 0.0
  %1075 = vmatprep.subr.mxu0 0.0
  %1076 = vmatpush2.msra.mxu0 0.0
  %1077 = vmatprep.subr.mxu0 0.0
  %1078 = vmatpush2.msra.mxu0 0.0
  %1079 = vmatprep.subr.mxu0 0.0
  %1080 = vmatpush2.msra.mxu0 0.0
  %1081 = vmatprep.subr.mxu0 0.0
  %1082 = vmatpush2.msra.mxu0 0.0
  %1083 = vmatprep.subr.mxu0 0.0
  %1084 = vmatpush2.msra.mxu0 0.0
  %1085 = vmatprep.subr.mxu0 0.0
  %1086 = vmatpush2.msra.mxu0 0.0
  %1087 = vmatprep.mubr.f32.mxu0 0.0
  %1088 = vmatmul.mubr.f32.gmra.mxu0 %v944
  %v1089 = vpop.f32.mrf.mxu0
  %v1090 = vadd.f32 0.0, %v1089
  %v1091 = vpop.f32.mrf.mxu0
  %v1092 = vadd.f32 0.0, %v1091
  %1093 = vdwg.mxu0
  %v1094 = vadd.f32 %v948, %v1019
  %v1095 = vadd.f32 %v949, %v1021
  %v1096 = vadd.f32 %v950, %v1090
  %v1097 = vadd.f32 %v951, %v1092
  %v1098 = vmul.f32 %v1094, 0.5
  %v1099 = vtanh.pop %v1098
  %v1100 = vmul.f32 %v1099, 0.5
  %v1101 = vadd.f32 %v1100, 0.5
  %v1102 = vmul.f32 %v1095, 0.5
  %v1103 = vtanh.pop %v1102
  %v1104 = vmul.f32 %v1103, 0.5
  %v1105 = vadd.f32 %v1104, 0.5
  %v1106 = vtanh.pop %v1096
  %v1107 = vmul.f32 %v1097, 0.5
  %v1108 = vtanh.pop %v1107
  %v1109 = vmul.f32 %v1108, 0.5
  %v1110 = vadd.f32 %v1109, 0.5
  %v1111 = vmul.f32 %v1105, %v942
  %v1112 = vmul.f32 %v1101, %v1106
  %v1113 = vadd.f32 %v1111, %v1112
  %v1114 = vtanh.pop %v1113
  %v1115 = vmul.f32 %v1110, %v1114
  %s1116 = scalar_lea.vmem %s4, 40
  %1117 = vst [vmem:[%s1116] sm:$0xff] %v1115
  %s1118 = scalar_lea.vmem %s0, 192
  %v1119 = vld [vmem:[%s1118] sm:$0xff]
  %v1120 = vld [vmem:[%s1118 + $0x8] sm:$0xff]
  %v1121 = vld [vmem:[%s1118 + $0x10] sm:$0xff]
  %v1122 = vld [vmem:[%s1118 + $0x18] sm:$0xff]
  %1123 = vmatprep.subr.mxu0 %v89
  %1124 = vmatpush1.msra.mxu0 %v88
  %1125 = vmatprep.subr.mxu0 %v85
  %1126 = vmatpush1.msra.mxu0 %v84
  %1127 = vmatprep.subr.mxu0 %v81
  %1128 = vmatpush1.msra.mxu0 %v80
  %1129 = vmatprep.subr.mxu0 %v77
  %1130 = vmatpush1.msra.mxu0 %v76
  %1131 = vmatprep.subr.mxu0 %v73
  %1132 = vmatpush1.msra.mxu0 %v72
  %1133 = vmatprep.subr.mxu0 %v69
  %1134 = vmatpush1.msra.mxu0 %v68
  %1135 = vmatprep.subr.mxu0 %v65
  %1136 = vmatpush1.msra.mxu0 %v64
  %1137 = vmatprep.subr.mxu0 %v61
  %1138 = vmatpush1.msra.mxu0 %v60
  %1139 = vmatprep.subr.mxu0 %v57
  %1140 = vmatpush1.msra.mxu0 %v56
  %1141 = vmatprep.subr.mxu0 %v53
  %1142 = vmatpush1.msra.mxu0 %v52
  %1143 = vmatprep.subr.mxu0 %v49
  %1144 = vmatpush1.msra.mxu0 %v48
  %1145 = vmatprep.subr.mxu0 %v45
  %1146 = vmatpush1.msra.mxu0 %v44
  %1147 = vmatprep.subr.mxu0 %v41
  %1148 = vmatpush1.msra.mxu0 %v40
  %1149 = vmatprep.subr.mxu0 %v37
  %1150 = vmatpush1.msra.mxu0 %v36
  %1151 = vmatprep.subr.mxu0 %v33
  %1152 = vmatpush1.msra.mxu0 %v32
  %1153 = vmatprep.subr.mxu0 %v29
  %1154 = vmatpush1.msra.mxu0 %v28
  %1155 = vmatprep.subr.mxu0 0.0
  %1156 = vmatpush2.msra.mxu0 0.0
  %1157 = vmatprep.subr.mxu0 0.0
  %1158 = vmatpush2.msra.mxu0 0.0
  %1159 = vmatprep.subr.mxu0 0.0
  %1160 = vmatpush2.msra.mxu0 0.0
  %1161 = vmatprep.subr.mxu0 0.0
  %1162 = vmatpush2.msra.mxu0 0.0
  %1163 = vmatprep.subr.mxu0 0.0
  %1164 = vmatpush2.msra.mxu0 0.0
  %1165 = vmatprep.subr.mxu0 0.0
  %1166 = vmatpush2.msra.mxu0 0.0
  %1167 = vmatprep.subr.mxu0 0.0
  %1168 = vmatpush2.msra.mxu0 0.0
  %1169 = vmatprep.subr.mxu0 0.0
  %1170 = vmatpush2.msra.mxu0 0.0
  %1171 = vmatprep.subr.mxu0 0.0
  %1172 = vmatpush2.msra.mxu0 0.0
  %1173 = vmatprep.subr.mxu0 0.0
  %1174 = vmatpush2.msra.mxu0 0.0
  %1175 = vmatprep.subr.mxu0 0.0
  %1176 = vmatpush2.msra.mxu0 0.0
  %1177 = vmatprep.subr.mxu0 0.0
  %1178 = vmatpush2.msra.mxu0 0.0
  %1179 = vmatprep.subr.mxu0 0.0
  %1180 = vmatpush2.msra.mxu0 0.0
  %1181 = vmatprep.subr.mxu0 0.0
  %1182 = vmatpush2.msra.mxu0 0.0
  %1183 = vmatprep.subr.mxu0 0.0
  %1184 = vmatpush2.msra.mxu0 0.0
  %1185 = vmatprep.subr.mxu0 0.0
  %1186 = vmatpush2.msra.mxu0 0.0
  %1187 = vmatprep.mubr.f32.mxu0 0.0
  %1188 = vmatmul.mubr.f32.gmra.mxu0 %v1115
  %v1189 = vpop.f32.mrf.mxu0
  %v1190 = vadd.f32 0.0, %v1189
  %v1191 = vpop.f32.mrf.mxu0
  %v1192 = vadd.f32 0.0, %v1191
  %1193 = vdwg.mxu0
  %1194 = vmatprep.subr.mxu0 %v91
  %1195 = vmatpush1.msra.mxu0 %v90
  %1196 = vmatprep.subr.mxu0 %v87
  %1197 = vmatpush1.msra.mxu0 %v86
  %1198 = vmatprep.subr.mxu0 %v83
  %1199 = vmatpush1.msra.mxu0 %v82
  %1200 = vmatprep.subr.mxu0 %v79
  %1201 = vmatpush1.msra.mxu0 %v78
  %1202 = vmatprep.subr.mxu0 %v75
  %1203 = vmatpush1.msra.mxu0 %v74
  %1204 = vmatprep.subr.mxu0 %v71
  %1205 = vmatpush1.msra.mxu0 %v70
  %1206 = vmatprep.subr.mxu0 %v67
  %1207 = vmatpush1.msra.mxu0 %v66
  %1208 = vmatprep.subr.mxu0 %v63
  %1209 = vmatpush1.msra.mxu0 %v62
  %1210 = vmatprep.subr.mxu0 %v59
  %1211 = vmatpush1.msra.mxu0 %v58
  %1212 = vmatprep.subr.mxu0 %v55
  %1213 = vmatpush1.msra.mxu0 %v54
  %1214 = vmatprep.subr.mxu0 %v51
  %1215 = vmatpush1.msra.mxu0 %v50
  %1216 = vmatprep.subr.mxu0 %v47
  %1217 = vmatpush1.msra.mxu0 %v46
  %1218 = vmatprep.subr.mxu0 %v43
  %1219 = vmatpush1.msra.mxu0 %v42
  %1220 = vmatprep.subr.mxu0 %v39
  %1221 = vmatpush1.msra.mxu0 %v38
  %1222 = vmatprep.subr.mxu0 %v35
  %1223 = vmatpush1.msra.mxu0 %v34
  %1224 = vmatprep.subr.mxu0 %v31
  %1225 = vmatpush1.msra.mxu0 %v30
  %1226 = vmatprep.subr.mxu0 0.0
  %1227 = vmatpush2.msra.mxu0 0.0
  %1228 = vmatprep.subr.mxu0 0.0
  %1229 = vmatpush2.msra.mxu0 0.0
  %1230 = vmatprep.subr.mxu0 0.0
  %1231 = vmatpush2.msra.mxu0 0.0
  %1232 = vmatprep.subr.mxu0 0.0
  %1233 = vmatpush2.msra.mxu0 0.0
  %1234 = vmatprep.subr.mxu0 0.0
  %1235 = vmatpush2.msra.mxu0 0.0
  %1236 = vmatprep.subr.mxu0 0.0
  %1237 = vmatpush2.msra.mxu0 0.0
  %1238 = vmatprep.subr.mxu0 0.0
  %1239 = vmatpush2.msra.mxu0 0.0
  %1240 = vmatprep.subr.mxu0 0.0
  %1241 = vmatpush2.msra.mxu0 0.0
  %1242 = vmatprep.subr.mxu0 0.0
  %1243 = vmatpush2.msra.mxu0 0.0
  %1244 = vmatprep.subr.mxu0 0.0
  %1245 = vmatpush2.msra.mxu0 0.0
  %1246 = vmatprep.subr.mxu0 0.0
  %1247 = vmatpush2.msra.mxu0 0.0
  %1248 = vmatprep.subr.mxu0 0.0
  %1249 = vmatpush2.msra.mxu0 0.0
  %1250 = vmatprep.subr.mxu0 0.0
  %1251 = vmatpush2.msra.mxu0 0.0
  %1252 = vmatprep.subr.mxu0 0.0
  %1253 = vmatpush2.msra.mxu0 0.0
  %1254 = vmatprep.subr.mxu0 0.0
  %1255 = vmatpush2.msra.mxu0 0.0
  %1256 = vmatprep.subr.mxu0 0.0
  %1257 = vmatpush2.msra.mxu0 0.0
  %1258 = vmatprep.mubr.f32.mxu0 0.0
  %1259 = vmatmul.mubr.f32.gmra.mxu0 %v1115
  %v1260 = vpop.f32.mrf.mxu0
  %v1261 = vadd.f32 0.0, %v1260
  %v1262 = vpop.f32.mrf.mxu0
  %v1263 = vadd.f32 0.0, %v1262
  %1264 = vdwg.mxu0
  %v1265 = vadd.f32 %v1119, %v1190
  %v1266 = vadd.f32 %v1120, %v1192
  %v1267 = vadd.f32 %v1121, %v1261
  %v1268 = vadd.f32 %v1122, %v1263
  %v1269 = vmul.f32 %v1265, 0.5
  %v1270 = vtanh.pop %v1269
  %v1271 = vmul.f32 %v1270, 0.5
  %v1272 = vadd.f32 %v1271, 0.5
  %v1273 = vmul.f32 %v1266, 0.5
  %v1274 = vtanh.pop %v1273
  %v1275 = vmul.f32 %v1274, 0.5
  %v1276 = vadd.f32 %v1275, 0.5
  %v1277 = vtanh.pop %v1267
  %v1278 = vmul.f32 %v1268, 0.5
  %v1279 = vtanh.pop %v1278
  %v1280 = vmul.f32 %v1279, 0.5
  %v1281 = vadd.f32 %v1280, 0.5
  %v1282 = vmul.f32 %v1276, %v1113
  %v1283 = vmul.f32 %v1272, %v1277
  %v1284 = vadd.f32 %v1282, %v1283
  %v1285 = vtanh.pop %v1284
  %v1286 = vmul.f32 %v1281, %v1285
  %s1287 = scalar_lea.vmem %s4, 48
  %1288 = vst [vmem:[%s1287] sm:$0xff] %v1286
  %s1289 = scalar_lea.vmem %s0, 224
  %v1290 = vld [vmem:[%s1289] sm:$0xff]
  %v1291 = vld [vmem:[%s1289 + $0x8] sm:$0xff]
  %v1292 = vld [vmem:[%s1289 + $0x10] sm:$0xff]
  %v1293 = vld [vmem:[%s1289 + $0x18] sm:$0xff]
  %1294 = vmatprep.subr.mxu0 %v89
  %1295 = vmatpush1.msra.mxu0 %v88
  %1296 = vmatprep.subr.mxu0 %v85
  %1297 = vmatpush1.msra.mxu0 %v84
  %1298 = vmatprep.subr.mxu0 %v81
  %1299 = vmatpush1.msra.mxu0 %v80
  %1300 = vmatprep.subr.mxu0 %v77
  %1301 = vmatpush1.msra.mxu0 %v76
  %1302 = vmatprep.subr.mxu0 %v73
  %1303 = vmatpush1.msra.mxu0 %v72
  %1304 = vmatprep.subr.mxu0 %v69
  %1305 = vmatpush1.msra.mxu0 %v68
  %1306 = vmatprep.subr.mxu0 %v65
  %1307 = vmatpush1.msra.mxu0 %v64
  %1308 = vmatprep.subr.mxu0 %v61
  %1309 = vmatpush1.msra.mxu0 %v60
  %1310 = vmatprep.subr.mxu0 %v57
  %1311 = vmatpush1.msra.mxu0 %v56
  %1312 = vmatprep.subr.mxu0 %v53
  %1313 = vmatpush1.msra.mxu0 %v52
  %1314 = vmatprep.subr.mxu0 %v49
  %1315 = vmatpush1.msra.mxu0 %v48
  %1316 = vmatprep.subr.mxu0 %v45
  %1317 = vmatpush1.msra.mxu0 %v44
  %1318 = vmatprep.subr.mxu0 %v41
  %1319 = vmatpush1.msra.mxu0 %v40
  %1320 = vmatprep.subr.mxu0 %v37
  %1321 = vmatpush1.msra.mxu0 %v36
  %1322 = vmatprep.subr.mxu0 %v33
  %1323 = vmatpush1.msra.mxu0 %v32
  %1324 = vmatprep.subr.mxu0 %v29
  %1325 = vmatpush1.msra.mxu0 %v28
  %1326 = vmatprep.subr.mxu0 0.0
  %1327 = vmatpush2.msra.mxu0 0.0
  %1328 = vmatprep.subr.mxu0 0.0
  %1329 = vmatpush2.msra.mxu0 0.0
  %1330 = vmatprep.subr.mxu0 0.0
  %1331 = vmatpush2.msra.mxu0 0.0
  %1332 = vmatprep.subr.mxu0 0.0
  %1333 = vmatpush2.msra.mxu0 0.0
  %1334 = vmatprep.subr.mxu0 0.0
  %1335 = vmatpush2.msra.mxu0 0.0
  %1336 = vmatprep.subr.mxu0 0.0
  %1337 = vmatpush2.msra.mxu0 0.0
  %1338 = vmatprep.subr.mxu0 0.0
  %1339 = vmatpush2.msra.mxu0 0.0
  %1340 = vmatprep.subr.mxu0 0.0
  %1341 = vmatpush2.msra.mxu0 0.0
  %1342 = vmatprep.subr.mxu0 0.0
  %1343 = vmatpush2.msra.mxu0 0.0
  %1344 = vmatprep.subr.mxu0 0.0
  %1345 = vmatpush2.msra.mxu0 0.0
  %1346 = vmatprep.subr.mxu0 0.0
  %1347 = vmatpush2.msra.mxu0 0.0
  %1348 = vmatprep.subr.mxu0 0.0
  %1349 = vmatpush2.msra.mxu0 0.0
  %1350 = vmatprep.subr.mxu0 0.0
  %1351 = vmatpush2.msra.mxu0 0.0
  %1352 = vmatprep.subr.mxu0 0.0
  %1353 = vmatpush2.msra.mxu0 0.0
  %1354 = vmatprep.subr.mxu0 0.0
  %1355 = vmatpush2.msra.mxu0 0.0
  %1356 = vmatprep.subr.mxu0 0.0
  %1357 = vmatpush2.msra.mxu0 0.0
  %1358 = vmatprep.mubr.f32.mxu0 0.0
  %1359 = vmatmul.mubr.f32.gmra.mxu0 %v1286
  %v1360 = vpop.f32.mrf.mxu0
  %v1361 = vadd.f32 0.0, %v1360
  %v1362 = vpop.f32.mrf.mxu0
  %v1363 = vadd.f32 0.0, %v1362
  %1364 = vdwg.mxu0
  %1365 = vmatprep.subr.mxu0 %v91
  %1366 = vmatpush1.msra.mxu0 %v90
  %1367 = vmatprep.subr.mxu0 %v87
  %1368 = vmatpush1.msra.mxu0 %v86
  %1369 = vmatprep.subr.mxu0 %v83
  %1370 = vmatpush1.msra.mxu0 %v82
  %1371 = vmatprep.subr.mxu0 %v79
  %1372 = vmatpush1.msra.mxu0 %v78
  %1373 = vmatprep.subr.mxu0 %v75
  %1374 = vmatpush1.msra.mxu0 %v74
  %1375 = vmatprep.subr.mxu0 %v71
  %1376 = vmatpush1.msra.mxu0 %v70
  %1377 = vmatprep.subr.mxu0 %v67
  %1378 = vmatpush1.msra.mxu0 %v66
  %1379 = vmatprep.subr.mxu0 %v63
  %1380 = vmatpush1.msra.mxu0 %v62
  %1381 = vmatprep.subr.mxu0 %v59
  %1382 = vmatpush1.msra.mxu0 %v58
  %1383 = vmatprep.subr.mxu0 %v55
  %1384 = vmatpush1.msra.mxu0 %v54
  %1385 = vmatprep.subr.mxu0 %v51
  %1386 = vmatpush1.msra.mxu0 %v50
  %1387 = vmatprep.subr.mxu0 %v47
  %1388 = vmatpush1.msra.mxu0 %v46
  %1389 = vmatprep.subr.mxu0 %v43
  %1390 = vmatpush1.msra.mxu0 %v42
  %1391 = vmatprep.subr.mxu0 %v39
  %1392 = vmatpush1.msra.mxu0 %v38
  %1393 = vmatprep.subr.mxu0 %v35
  %1394 = vmatpush1.msra.mxu0 %v34
  %1395 = vmatprep.subr.mxu0 %v31
  %1396 = vmatpush1.msra.mxu0 %v30
  %1397 = vmatprep.subr.mxu0 0.0
  %1398 = vmatpush2.msra.mxu0 0.0
  %1399 = vmatprep.subr.mxu0 0.0
  %1400 = vmatpush2.msra.mxu0 0.0
  %1401 = vmatprep.subr.mxu0 0.0
  %1402 = vmatpush2.msra.mxu0 0.0
  %1403 = vmatprep.subr.mxu0 0.0
  %1404 = vmatpush2.msra.mxu0 0.0
  %1405 = vmatprep.subr.mxu0 0.0
  %1406 = vmatpush2.msra.mxu0 0.0
  %1407 = vmatprep.subr.mxu0 0.0
  %1408 = vmatpush2.msra.mxu0 0.0
  %1409 = vmatprep.subr.mxu0 0.0
  %1410 = vmatpush2.msra.mxu0 0.0
  %1411 = vmatprep.subr.mxu0 0.0
  %1412 = vmatpush2.msra.mxu0 0.0
  %1413 = vmatprep.subr.mxu0 0.0
  %1414 = vmatpush2.msra.mxu0 0.0
  %1415 = vmatprep.subr.mxu0 0.0
  %1416 = vmatpush2.msra.mxu0 0.0
  %1417 = vmatprep.subr.mxu0 0.0
  %1418 = vmatpush2.msra.mxu0 0.0
  %1419 = vmatprep.subr.mxu0 0.0
  %1420 = vmatpush2.msra.mxu0 0.0
  %1421 = vmatprep.subr.mxu0 0.0
  %1422 = vmatpush2.msra.mxu0 0.0
  %1423 = vmatprep.subr.mxu0 0.0
  %1424 = vmatpush2.msra.mxu0 0.0
  %1425 = vmatprep.subr.mxu0 0.0
  %1426 = vmatpush2.msra.mxu0 0.0
  %1427 = vmatprep.subr.mxu0 0.0
  %1428 = vmatpush2.msra.mxu0 0.0
  %1429 = vmatprep.mubr.f32.mxu0 0.0
  %1430 = vmatmul.mubr.f32.gmra.mxu0 %v1286
  %v1431 = vpop.f32.mrf.mxu0
  %v1432 = vadd.f32 0.0, %v1431
  %v1433 = vpop.f32.mrf.mxu0
  %v1434 = vadd.f32 0.0, %v1433
  %1435 = vdwg.mxu0
  %v1436 = vadd.f32 %v1290, %v1361
  %v1437 = vadd.f32 %v1291, %v1363
  %v1438 = vadd.f32 %v1292, %v1432
  %v1439 = vadd.f32 %v1293, %v1434
  %v1440 = vmul.f32 %v1436, 0.5
  %v1441 = vtanh.pop %v1440
  %v1442 = vmul.f32 %v1441, 0.5
  %v1443 = vadd.f32 %v1442, 0.5
  %v1444 = vmul.f32 %v1437, 0.5
  %v1445 = vtanh.pop %v1444
  %v1446 = vmul.f32 %v1445, 0.5
  %v1447 = vadd.f32 %v1446, 0.5
  %v1448 = vtanh.pop %v1438
  %v1449 = vmul.f32 %v1439, 0.5
  %v1450 = vtanh.pop %v1449
  %v1451 = vmul.f32 %v1450, 0.5
  %v1452 = vadd.f32 %v1451, 0.5
  %v1453 = vmul.f32 %v1447, %v1284
  %v1454 = vmul.f32 %v1443, %v1448
  %v1455 = vadd.f32 %v1453, %v1454
  %v1456 = vtanh.pop %v1455
  %v1457 = vmul.f32 %v1452, %v1456
  %s1458 = scalar_lea.vmem %s4, 56
  %1459 = vst [vmem:[%s1458] sm:$0xff] %v1457
  %1460 = vst [vmem:[%s5] sm:$0xff] %v1457
  %1461 = vst [vmem:[%s6] sm:$0xff] %v1455
  // Predicated region
  $region22: #{decoder_forward.4} parent=0 // pred_check
    _
  $region23: #{decoder_forward.4} parent=0 // pred_check_branch
    %1463 = sbr.rel (0) target = $region25
  $region24: #{decoder_forward.4} parent=0 // pred_region
    _
  $region25: #{decoder_forward.4} parent=0 // pred_fallthru
    _
  // Predicated region
  $region26: #{decoder_forward.4} parent=0 // pred_check
    _
  $region27: #{decoder_forward.4} parent=0 // pred_check_branch
    %1465 = sbr.rel (0) target = $region29
  $region28: #{decoder_forward.4} parent=0 // pred_region
    _
  $region29: #{decoder_forward.4} parent=0 // pred_fallthru
    _
  // Predicated region
  $region30: #{decoder_forward.4} parent=0 // pred_check
    _
  $region31: #{decoder_forward.4} parent=0 // pred_check_branch
    %1467 = sbr.rel (0) target = $region33
  $region32: #{decoder_forward.4} parent=0 // pred_region
    _
  $region33: #{decoder_forward.4} parent=0 // pred_fallthru
    _
  // Predicated region
  $region34: #{decoder_forward.4} parent=0 // pred_check
    _
  $region35: #{decoder_forward.4} parent=0 // pred_check_branch
    %1469 = sbr.rel (0) target = $region37
  $region36: #{decoder_forward.4} parent=0 // pred_region
    _
  $region37: #{decoder_forward.4} parent=0 // pred_fallthru
    _
  // Predicated region
  $region38: #{decoder_forward.4} parent=0 // pred_check
    _
  $region39: #{decoder_forward.4} parent=0 // pred_check_branch
    %1471 = sbr.rel (0) target = $region41
  $region40: #{decoder_forward.4} parent=0 // pred_region
    _
  $region41: #{decoder_forward.4} parent=0 // pred_fallthru
    _
  // Predicated region
  $region42: #{decoder_forward.4} parent=0 // pred_check
    _
  $region43: #{decoder_forward.4} parent=0 // pred_check_branch
    %1473 = sbr.rel (0) target = $region45
  $region44: #{decoder_forward.4} parent=0 // pred_region
    _
  $region45: #{decoder_forward.4} parent=0 // pred_fallthru
    _

</llo_original>
